<compile_context>
chip_gen: v7x
topology: tpu7x:2x2x1
jax: 0.10.0
libtpu: 0.0.40
codegen_flags: <defaults>
</compile_context>

<pallas_src>
import functools

import jax
import jax.numpy as jnp
from jax.experimental import pallas as pl
from jax.experimental.pallas import tpu as pltpu


def mha_kernel(x_ref, wqkv_ref, bqkv_ref, wo_ref, bo_ref, out_ref, probs_ref,
               *, num_heads, hidden_size):
    Bb, S, D_in = x_ref.shape
    H, Dh = num_heads, hidden_size
    HD = H * Dh
    cdt = x_ref.dtype            # MXU operand dtype (bf16 in the fast path)

    # ---- fused QKV projection: one wide MXU pass, M = Bb*S, N = 3*HD ----
    x2 = x_ref[...].reshape(Bb * S, D_in)            # collapse leading dims (free)
    qkv = jnp.dot(x2, wqkv_ref[...], preferred_element_type=jnp.float32)
    qkv = qkv + bqkv_ref[...]                        # f32 bias add, once
    qkv3 = qkv.astype(cdt).reshape(Bb, S, 3 * HD)    # split leading dim (free)

    scale = 1.0 / (Dh ** 0.5)
    ctx_heads = []
    probs_sum = None

    # Static unroll over heads.  Each per-head slab starts at a multiple of Dh on
    # the lane axis (head-major Wqkv columns), so at production Dh (>=128) these
    # slices are 128-lane-aligned views.
    for h in range(H):
        q_h = qkv3[:, :, h * Dh:(h + 1) * Dh]                     # (Bb, S, Dh)
        k_h = qkv3[:, :, HD + h * Dh:HD + (h + 1) * Dh]
        v_h = qkv3[:, :, 2 * HD + h * Dh:2 * HD + (h + 1) * Dh]

        # scores: batched over Bb, contract last dims (no .T needed)
        s = jnp.einsum('bqd,bkd->bqk', q_h, k_h,
                       preferred_element_type=jnp.float32) * scale  # (Bb, S, S) f32

        # f32 softmax; approx reciprocal (EUP) + one Newton step for f32 accuracy
        m = jnp.max(s, axis=-1, keepdims=True)
        e = jnp.exp(s - m)
        denom = jnp.sum(e, axis=-1, keepdims=True)
        inv = pl.reciprocal(denom, approx=True)
        inv = inv * (2.0 - denom * inv)
        p = e * inv                                                # (Bb, S, S) f32

        ctx_h = jnp.einsum('bqk,bkd->bqd', p.astype(cdt), v_h,
                           preferred_element_type=jnp.float32).astype(cdt)
        ctx_heads.append(ctx_h)
        probs_sum = p if probs_sum is None else probs_sum + p

    # ---- output projection: single matmul with K = HD (one lane-axis concat) ----
    ctx = jnp.concatenate(ctx_heads, axis=-1).reshape(Bb * S, HD)
    out = jnp.dot(ctx, wo_ref[...], preferred_element_type=jnp.float32)
    out = out + bo_ref[...]                                        # f32 bias add

    out_ref[...] = out.reshape(Bb, S, D_in).astype(out_ref.dtype)
    probs_ref[...] = (probs_sum * (1.0 / H)).astype(probs_ref.dtype)


def mha_forward(x, params, *, num_heads, hidden_size, block_b=None,
                compute_dtype=jnp.bfloat16):
    B, S, D_in = x.shape
    HD = num_heads * hidden_size
    wq, bq, wk, bk, wv, bv, wo, bo = params

    # Fuse the three projection weights / biases (head-major columns within each).
    wqkv = jnp.concatenate([wq, wk, wv], axis=1).astype(compute_dtype)  # (D_in, 3*HD)
    bqkv = jnp.concatenate([bq, bk, bv], axis=1).astype(jnp.float32)    # (1, 3*HD)
    wo_c = wo.astype(compute_dtype)                                     # (HD, D_in)
    bo_c = bo.astype(jnp.float32)                                       # (1, D_in)
    x_c = x.astype(compute_dtype)

    if block_b is None:
        # >= 2 grid steps along the "parallel" axis so both v7x TensorCores get work.
        block_b = 1 if B > 1 else B
    assert B % block_b == 0, "block_b must divide B"

    kernel = functools.partial(mha_kernel, num_heads=num_heads,
                               hidden_size=hidden_size)

    def const_spec(arr):
        return pl.BlockSpec(arr.shape, lambda b: (0,) * arr.ndim)

    # Explicit scoped-VMEM budget: double-buffered x/out/probs blocks + resident
    # weights, with generous headroom for intermediates.
    isz = jnp.dtype(compute_dtype).itemsize
    blk_bytes = (block_b * S * D_in * isz            # x block
                 + block_b * S * D_in * 4            # out block (f32)
                 + block_b * S * S * 4)              # probs block (f32)
    w_bytes = (wqkv.size + wo_c.size) * isz + (bqkv.size + bo_c.size) * 4
    vmem_limit = int(min(max(4 * (2 * blk_bytes + 2 * w_bytes), 16 * 2**20),
                         48 * 2**20))

    out, probs = pl.pallas_call(
        kernel,
        out_shape=(
            jax.ShapeDtypeStruct((B, S, D_in), jnp.float32),
            jax.ShapeDtypeStruct((B, S, S), jnp.float32),
        ),
        grid=(B // block_b,),
        in_specs=[
            pl.BlockSpec((block_b, S, D_in), lambda b: (b, 0, 0)),  # x
            const_spec(wqkv),                                       # Wqkv (resident)
            const_spec(bqkv),                                       # bqkv
            const_spec(wo_c),                                       # Wo
            const_spec(bo_c),                                       # bo
        ],
        out_specs=(
            pl.BlockSpec((block_b, S, D_in), lambda b: (b, 0, 0)),
            pl.BlockSpec((block_b, S, S), lambda b: (b, 0, 0)),
        ),
        compiler_params=pltpu.CompilerParams(
            dimension_semantics=("parallel",),
            vmem_limit_bytes=vmem_limit),
    )(x_c, wqkv, bqkv, wo_c, bo_c)
    return out, probs


def reference_mha(x, params, *, num_heads, hidden_size):
    """Pure-JAX f32 reference mirroring the PyTorch forward (mask=None)."""
    wq, bq, wk, bk, wv, bv, wo, bo = params
    B, S, _ = x.shape
    q = x @ wq + bq
    k = x @ wk + bk
    v = x @ wv + bv

    def split(t):
        return t.reshape(B, S, num_heads, hidden_size).transpose(0, 2, 1, 3)

    q, k, v = split(q), split(k), split(v)
    scores = jnp.einsum('bhqd,bhkd->bhqk', q, k) / (hidden_size ** 0.5)
    probs = jax.nn.softmax(scores, axis=-1)
    attn = jnp.einsum('bhqk,bhkd->bhqd', probs, v)
    attn = attn.transpose(0, 2, 1, 3).reshape(B, S, num_heads * hidden_size)
    out = attn @ wo + bo
    return out, jnp.mean(probs, axis=1)


if __name__ == "__main__":
    # Small shapes consistent with the module's forward.
    batch, seq, input_size, hidden_size, num_heads = 2, 8, 32, 16, 4
    HD = hidden_size * num_heads

    key = jax.random.PRNGKey(0)
    ks = jax.random.split(key, 9)

    x = jax.random.normal(ks[0], (batch, seq, input_size), jnp.float32)

    def init_w(k, shape, fan_in):
        bound = 1.0 / (fan_in ** 0.5)
        return jax.random.uniform(k, shape, jnp.float32, -bound, bound)

    wq = init_w(ks[1], (input_size, HD), input_size)
    bq = init_w(ks[2], (1, HD), input_size)
    wk = init_w(ks[3], (input_size, HD), input_size)
    bk = init_w(ks[4], (1, HD), input_size)
    wv = init_w(ks[5], (input_size, HD), input_size)
    bv = init_w(ks[6], (1, HD), input_size)
    wo = init_w(ks[7], (HD, input_size), HD)
    bo = init_w(ks[8], (1, input_size), HD)

    params = (wq, bq, wk, bk, wv, bv, wo, bo)

    ref_out, ref_probs = reference_mha(x, params, num_heads=num_heads,
                                       hidden_size=hidden_size)

    # f32 compute path: tight correctness check.
    out32, probs32 = mha_forward(x, params, num_heads=num_heads,
                                 hidden_size=hidden_size,
                                 compute_dtype=jnp.float32)
    out32 = jax.block_until_ready(out32)
    probs32 = jax.block_until_ready(probs32)
    assert out32.shape == (batch, seq, input_size)
    assert probs32.shape == (batch, seq, seq)
    assert jnp.allclose(out32, ref_out, atol=2e-4, rtol=2e-4)
    assert jnp.allclose(probs32, ref_probs, atol=2e-4, rtol=2e-4)

    # bf16 MXU path (default / recommended): loose check vs. the f32 reference.
    out_bf, probs_bf = mha_forward(x, params, num_heads=num_heads,
                                   hidden_size=hidden_size,
                                   compute_dtype=jnp.bfloat16)
    out_bf = jax.block_until_ready(out_bf)
    probs_bf = jax.block_until_ready(probs_bf)
    assert jnp.allclose(out_bf, ref_out, atol=5e-2, rtol=5e-2)
    assert jnp.allclose(probs_bf, ref_probs, atol=5e-2, rtol=5e-2)

    print("KERNEL_OK")
</pallas_src>

<mosaic_0001>
module attributes {stable_mosaic.version = 11 : i64} {
  func.func @mha_kernel(%arg0: i32, %arg1: memref<1x8x32xf32, #tpu.memory_space<vmem>>, %arg2: memref<32x192xf32, #tpu.memory_space<vmem>>, %arg3: memref<1x192xf32, #tpu.memory_space<vmem>>, %arg4: memref<64x32xf32, #tpu.memory_space<vmem>>, %arg5: memref<1x32xf32, #tpu.memory_space<vmem>>, %arg6: memref<1x8x32xf32, #tpu.memory_space<vmem>>, %arg7: memref<1x8x8xf32, #tpu.memory_space<vmem>>) attributes {dimension_semantics = [#tpu.dimension_semantics<parallel>], iteration_bounds = array<i64: 2>, scalar_prefetch = 0 : i64, scratch_operands = 0 : i64, tpu.core_type = #tpu.core_type<tc>, window_params = [{transform_indices = @transform_0, window_bounds = array<i64: 1, 8, 32>}, {pipeline_mode = #tpu.pipeline_mode<synchronous>, transform_indices = @transform_1, window_bounds = array<i64: 32, 192>}, {pipeline_mode = #tpu.pipeline_mode<synchronous>, transform_indices = @transform_2, window_bounds = array<i64: 1, 192>}, {pipeline_mode = #tpu.pipeline_mode<synchronous>, transform_indices = @transform_3, window_bounds = array<i64: 64, 32>}, {pipeline_mode = #tpu.pipeline_mode<synchronous>, transform_indices = @transform_4, window_bounds = array<i64: 1, 32>}, {transform_indices = @transform_5, window_bounds = array<i64: 1, 8, 32>}, {transform_indices = @transform_6, window_bounds = array<i64: 1, 8, 8>}]} {
    %c0 = arith.constant 0 : index
    %c0_0 = arith.constant 0 : index
    %c0_1 = arith.constant 0 : index
    %0 = vector.load %arg1[%c0, %c0_0, %c0_1] : memref<1x8x32xf32, #tpu.memory_space<vmem>>, vector<1x8x32xf32>
    %1 = vector.shape_cast %0 : vector<1x8x32xf32> to vector<8x32xf32>
    %c0_2 = arith.constant 0 : index
    %c0_3 = arith.constant 0 : index
    %2 = vector.load %arg2[%c0_2, %c0_3] : memref<32x192xf32, #tpu.memory_space<vmem>>, vector<32x192xf32>
    %cst = arith.constant dense<0.000000e+00> : vector<8x192xf32>
    %3 = tpu.matmul %1, %2, %cst {dimension_numbers = #tpu.dot_dimension_numbers<[1], [0], [0], [1], [0, 0, 1, 1], [], []>} : vector<8x32xf32>, vector<32x192xf32>, vector<8x192xf32> -> vector<8x192xf32>
    %c0_4 = arith.constant 0 : index
    %c0_5 = arith.constant 0 : index
    %4 = vector.load %arg3[%c0_4, %c0_5] : memref<1x192xf32, #tpu.memory_space<vmem>>, vector<1x192xf32>
    %5 = vector.broadcast %4 : vector<1x192xf32> to vector<8x192xf32>
    %6 = arith.addf %3, %5 : vector<8x192xf32>
    %7 = vector.shape_cast %6 : vector<8x192xf32> to vector<1x8x192xf32>
    %8 = vector.extract_strided_slice %7 {offsets = [0, 0, 0], sizes = [1, 8, 16], strides = [1, 1, 1]} : vector<1x8x192xf32> to vector<1x8x16xf32>
    %9 = vector.extract_strided_slice %7 {offsets = [0, 0, 64], sizes = [1, 8, 16], strides = [1, 1, 1]} : vector<1x8x192xf32> to vector<1x8x16xf32>
    %10 = vector.extract_strided_slice %7 {offsets = [0, 0, 128], sizes = [1, 8, 16], strides = [1, 1, 1]} : vector<1x8x192xf32> to vector<1x8x16xf32>
    "tpu.trace_start"() <{level = 10 : i32, message = "bqd,bkd->bqk"}> : () -> ()
    %cst_6 = arith.constant dense<0.000000e+00> : vector<1x8x8xf32>
    %11 = tpu.matmul %8, %9, %cst_6 {dimension_numbers = #tpu.dot_dimension_numbers<[2], [2], [1], [1], [0, 0, 0, 1, 1, 1], [0], [0]>} : vector<1x8x16xf32>, vector<1x8x16xf32>, vector<1x8x8xf32> -> vector<1x8x8xf32>
    "tpu.trace_stop"() : () -> ()
    %cst_7 = arith.constant 2.500000e-01 : f32
    %12 = vector.broadcast %cst_7 : f32 to vector<1x8x8xf32>
    %13 = arith.mulf %11, %12 : vector<1x8x8xf32>
    %cst_8 = arith.constant dense<0xFF800000> : vector<1x8xf32>
    %14 = vector.multi_reduction <maximumf>, %13, %cst_8 [2] : vector<1x8x8xf32> to vector<1x8xf32>
    %15 = vector.shape_cast %14 : vector<1x8xf32> to vector<1x8x1xf32>
    %16 = vector.broadcast %15 : vector<1x8x1xf32> to vector<1x8x8xf32>
    %17 = arith.subf %13, %16 : vector<1x8x8xf32>
    %18 = math.exp %17 : vector<1x8x8xf32>
    %cst_9 = arith.constant dense<0.000000e+00> : vector<1x8xf32>
    %19 = vector.multi_reduction <add>, %18, %cst_9 [2] : vector<1x8x8xf32> to vector<1x8xf32>
    %20 = vector.shape_cast %19 : vector<1x8xf32> to vector<1x8x1xf32>
    %21 = tpu.reciprocal %20 {approx = true} : vector<1x8x1xf32> -> vector<1x8x1xf32>
    %22 = arith.mulf %20, %21 : vector<1x8x1xf32>
    %cst_10 = arith.constant 2.000000e+00 : f32
    %23 = vector.broadcast %cst_10 : f32 to vector<1x8x1xf32>
    %24 = arith.subf %23, %22 : vector<1x8x1xf32>
    %25 = arith.mulf %21, %24 : vector<1x8x1xf32>
    %26 = vector.broadcast %25 : vector<1x8x1xf32> to vector<1x8x8xf32>
    %27 = arith.mulf %18, %26 : vector<1x8x8xf32>
    "tpu.trace_start"() <{level = 10 : i32, message = "bqk,bkd->bqd"}> : () -> ()
    %cst_11 = arith.constant dense<0.000000e+00> : vector<1x8x16xf32>
    %28 = tpu.matmul %27, %10, %cst_11 {dimension_numbers = #tpu.dot_dimension_numbers<[2], [1], [1], [2], [0, 0, 0, 1, 1, 2], [0], [0]>} : vector<1x8x8xf32>, vector<1x8x16xf32>, vector<1x8x16xf32> -> vector<1x8x16xf32>
    "tpu.trace_stop"() : () -> ()
    %29 = vector.extract_strided_slice %7 {offsets = [0, 0, 16], sizes = [1, 8, 16], strides = [1, 1, 1]} : vector<1x8x192xf32> to vector<1x8x16xf32>
    %30 = vector.extract_strided_slice %7 {offsets = [0, 0, 80], sizes = [1, 8, 16], strides = [1, 1, 1]} : vector<1x8x192xf32> to vector<1x8x16xf32>
    %31 = vector.extract_strided_slice %7 {offsets = [0, 0, 144], sizes = [1, 8, 16], strides = [1, 1, 1]} : vector<1x8x192xf32> to vector<1x8x16xf32>
    "tpu.trace_start"() <{level = 10 : i32, message = "bqd,bkd->bqk"}> : () -> ()
    %cst_12 = arith.constant dense<0.000000e+00> : vector<1x8x8xf32>
    %32 = tpu.matmul %29, %30, %cst_12 {dimension_numbers = #tpu.dot_dimension_numbers<[2], [2], [1], [1], [0, 0, 0, 1, 1, 1], [0], [0]>} : vector<1x8x16xf32>, vector<1x8x16xf32>, vector<1x8x8xf32> -> vector<1x8x8xf32>
    "tpu.trace_stop"() : () -> ()
    %cst_13 = arith.constant 2.500000e-01 : f32
    %33 = vector.broadcast %cst_13 : f32 to vector<1x8x8xf32>
    %34 = arith.mulf %32, %33 : vector<1x8x8xf32>
    %cst_14 = arith.constant dense<0xFF800000> : vector<1x8xf32>
    %35 = vector.multi_reduction <maximumf>, %34, %cst_14 [2] : vector<1x8x8xf32> to vector<1x8xf32>
    %36 = vector.shape_cast %35 : vector<1x8xf32> to vector<1x8x1xf32>
    %37 = vector.broadcast %36 : vector<1x8x1xf32> to vector<1x8x8xf32>
    %38 = arith.subf %34, %37 : vector<1x8x8xf32>
    %39 = math.exp %38 : vector<1x8x8xf32>
    %cst_15 = arith.constant dense<0.000000e+00> : vector<1x8xf32>
    %40 = vector.multi_reduction <add>, %39, %cst_15 [2] : vector<1x8x8xf32> to vector<1x8xf32>
    %41 = vector.shape_cast %40 : vector<1x8xf32> to vector<1x8x1xf32>
    %42 = tpu.reciprocal %41 {approx = true} : vector<1x8x1xf32> -> vector<1x8x1xf32>
    %43 = arith.mulf %41, %42 : vector<1x8x1xf32>
    %cst_16 = arith.constant 2.000000e+00 : f32
    %44 = vector.broadcast %cst_16 : f32 to vector<1x8x1xf32>
    %45 = arith.subf %44, %43 : vector<1x8x1xf32>
    %46 = arith.mulf %42, %45 : vector<1x8x1xf32>
    %47 = vector.broadcast %46 : vector<1x8x1xf32> to vector<1x8x8xf32>
    %48 = arith.mulf %39, %47 : vector<1x8x8xf32>
    "tpu.trace_start"() <{level = 10 : i32, message = "bqk,bkd->bqd"}> : () -> ()
    %cst_17 = arith.constant dense<0.000000e+00> : vector<1x8x16xf32>
    %49 = tpu.matmul %48, %31, %cst_17 {dimension_numbers = #tpu.dot_dimension_numbers<[2], [1], [1], [2], [0, 0, 0, 1, 1, 2], [0], [0]>} : vector<1x8x8xf32>, vector<1x8x16xf32>, vector<1x8x16xf32> -> vector<1x8x16xf32>
    "tpu.trace_stop"() : () -> ()
    %50 = arith.addf %27, %48 : vector<1x8x8xf32>
    %51 = vector.extract_strided_slice %7 {offsets = [0, 0, 32], sizes = [1, 8, 16], strides = [1, 1, 1]} : vector<1x8x192xf32> to vector<1x8x16xf32>
    %52 = vector.extract_strided_slice %7 {offsets = [0, 0, 96], sizes = [1, 8, 16], strides = [1, 1, 1]} : vector<1x8x192xf32> to vector<1x8x16xf32>
    %53 = vector.extract_strided_slice %7 {offsets = [0, 0, 160], sizes = [1, 8, 16], strides = [1, 1, 1]} : vector<1x8x192xf32> to vector<1x8x16xf32>
    "tpu.trace_start"() <{level = 10 : i32, message = "bqd,bkd->bqk"}> : () -> ()
    %cst_18 = arith.constant dense<0.000000e+00> : vector<1x8x8xf32>
    %54 = tpu.matmul %51, %52, %cst_18 {dimension_numbers = #tpu.dot_dimension_numbers<[2], [2], [1], [1], [0, 0, 0, 1, 1, 1], [0], [0]>} : vector<1x8x16xf32>, vector<1x8x16xf32>, vector<1x8x8xf32> -> vector<1x8x8xf32>
    "tpu.trace_stop"() : () -> ()
    %cst_19 = arith.constant 2.500000e-01 : f32
    %55 = vector.broadcast %cst_19 : f32 to vector<1x8x8xf32>
    %56 = arith.mulf %54, %55 : vector<1x8x8xf32>
    %cst_20 = arith.constant dense<0xFF800000> : vector<1x8xf32>
    %57 = vector.multi_reduction <maximumf>, %56, %cst_20 [2] : vector<1x8x8xf32> to vector<1x8xf32>
    %58 = vector.shape_cast %57 : vector<1x8xf32> to vector<1x8x1xf32>
    %59 = vector.broadcast %58 : vector<1x8x1xf32> to vector<1x8x8xf32>
    %60 = arith.subf %56, %59 : vector<1x8x8xf32>
    %61 = math.exp %60 : vector<1x8x8xf32>
    %cst_21 = arith.constant dense<0.000000e+00> : vector<1x8xf32>
    %62 = vector.multi_reduction <add>, %61, %cst_21 [2] : vector<1x8x8xf32> to vector<1x8xf32>
    %63 = vector.shape_cast %62 : vector<1x8xf32> to vector<1x8x1xf32>
    %64 = tpu.reciprocal %63 {approx = true} : vector<1x8x1xf32> -> vector<1x8x1xf32>
    %65 = arith.mulf %63, %64 : vector<1x8x1xf32>
    %cst_22 = arith.constant 2.000000e+00 : f32
    %66 = vector.broadcast %cst_22 : f32 to vector<1x8x1xf32>
    %67 = arith.subf %66, %65 : vector<1x8x1xf32>
    %68 = arith.mulf %64, %67 : vector<1x8x1xf32>
    %69 = vector.broadcast %68 : vector<1x8x1xf32> to vector<1x8x8xf32>
    %70 = arith.mulf %61, %69 : vector<1x8x8xf32>
    "tpu.trace_start"() <{level = 10 : i32, message = "bqk,bkd->bqd"}> : () -> ()
    %cst_23 = arith.constant dense<0.000000e+00> : vector<1x8x16xf32>
    %71 = tpu.matmul %70, %53, %cst_23 {dimension_numbers = #tpu.dot_dimension_numbers<[2], [1], [1], [2], [0, 0, 0, 1, 1, 2], [0], [0]>} : vector<1x8x8xf32>, vector<1x8x16xf32>, vector<1x8x16xf32> -> vector<1x8x16xf32>
    "tpu.trace_stop"() : () -> ()
    %72 = arith.addf %50, %70 : vector<1x8x8xf32>
    %73 = vector.extract_strided_slice %7 {offsets = [0, 0, 48], sizes = [1, 8, 16], strides = [1, 1, 1]} : vector<1x8x192xf32> to vector<1x8x16xf32>
    %74 = vector.extract_strided_slice %7 {offsets = [0, 0, 112], sizes = [1, 8, 16], strides = [1, 1, 1]} : vector<1x8x192xf32> to vector<1x8x16xf32>
    %75 = vector.extract_strided_slice %7 {offsets = [0, 0, 176], sizes = [1, 8, 16], strides = [1, 1, 1]} : vector<1x8x192xf32> to vector<1x8x16xf32>
    "tpu.trace_start"() <{level = 10 : i32, message = "bqd,bkd->bqk"}> : () -> ()
    %cst_24 = arith.constant dense<0.000000e+00> : vector<1x8x8xf32>
    %76 = tpu.matmul %73, %74, %cst_24 {dimension_numbers = #tpu.dot_dimension_numbers<[2], [2], [1], [1], [0, 0, 0, 1, 1, 1], [0], [0]>} : vector<1x8x16xf32>, vector<1x8x16xf32>, vector<1x8x8xf32> -> vector<1x8x8xf32>
    "tpu.trace_stop"() : () -> ()
    %cst_25 = arith.constant 2.500000e-01 : f32
    %77 = vector.broadcast %cst_25 : f32 to vector<1x8x8xf32>
    %78 = arith.mulf %76, %77 : vector<1x8x8xf32>
    %cst_26 = arith.constant dense<0xFF800000> : vector<1x8xf32>
    %79 = vector.multi_reduction <maximumf>, %78, %cst_26 [2] : vector<1x8x8xf32> to vector<1x8xf32>
    %80 = vector.shape_cast %79 : vector<1x8xf32> to vector<1x8x1xf32>
    %81 = vector.broadcast %80 : vector<1x8x1xf32> to vector<1x8x8xf32>
    %82 = arith.subf %78, %81 : vector<1x8x8xf32>
    %83 = math.exp %82 : vector<1x8x8xf32>
    %cst_27 = arith.constant dense<0.000000e+00> : vector<1x8xf32>
    %84 = vector.multi_reduction <add>, %83, %cst_27 [2] : vector<1x8x8xf32> to vector<1x8xf32>
    %85 = vector.shape_cast %84 : vector<1x8xf32> to vector<1x8x1xf32>
    %86 = tpu.reciprocal %85 {approx = true} : vector<1x8x1xf32> -> vector<1x8x1xf32>
    %87 = arith.mulf %85, %86 : vector<1x8x1xf32>
    %cst_28 = arith.constant 2.000000e+00 : f32
    %88 = vector.broadcast %cst_28 : f32 to vector<1x8x1xf32>
    %89 = arith.subf %88, %87 : vector<1x8x1xf32>
    %90 = arith.mulf %86, %89 : vector<1x8x1xf32>
    %91 = vector.broadcast %90 : vector<1x8x1xf32> to vector<1x8x8xf32>
    %92 = arith.mulf %83, %91 : vector<1x8x8xf32>
    "tpu.trace_start"() <{level = 10 : i32, message = "bqk,bkd->bqd"}> : () -> ()
    %cst_29 = arith.constant dense<0.000000e+00> : vector<1x8x16xf32>
    %93 = tpu.matmul %92, %75, %cst_29 {dimension_numbers = #tpu.dot_dimension_numbers<[2], [1], [1], [2], [0, 0, 0, 1, 1, 2], [0], [0]>} : vector<1x8x8xf32>, vector<1x8x16xf32>, vector<1x8x16xf32> -> vector<1x8x16xf32>
    "tpu.trace_stop"() : () -> ()
    %94 = arith.addf %72, %92 : vector<1x8x8xf32>
    %95 = tpu.concatenate %28, %49, %71, %93 in 2 : vector<1x8x16xf32>, vector<1x8x16xf32>, vector<1x8x16xf32>, vector<1x8x16xf32> -> vector<1x8x64xf32>
    %96 = vector.shape_cast %95 : vector<1x8x64xf32> to vector<8x64xf32>
    %c0_30 = arith.constant 0 : index
    %c0_31 = arith.constant 0 : index
    %97 = vector.load %arg4[%c0_30, %c0_31] : memref<64x32xf32, #tpu.memory_space<vmem>>, vector<64x32xf32>
    %cst_32 = arith.constant dense<0.000000e+00> : vector<8x32xf32>
    %98 = tpu.matmul %96, %97, %cst_32 {dimension_numbers = #tpu.dot_dimension_numbers<[1], [0], [0], [1], [0, 0, 1, 1], [], []>} : vector<8x64xf32>, vector<64x32xf32>, vector<8x32xf32> -> vector<8x32xf32>
    %c0_33 = arith.constant 0 : index
    %c0_34 = arith.constant 0 : index
    %99 = vector.load %arg5[%c0_33, %c0_34] : memref<1x32xf32, #tpu.memory_space<vmem>>, vector<1x32xf32>
    %100 = vector.broadcast %99 : vector<1x32xf32> to vector<8x32xf32>
    %101 = arith.addf %98, %100 : vector<8x32xf32>
    %102 = vector.shape_cast %101 : vector<8x32xf32> to vector<1x8x32xf32>
    %c0_35 = arith.constant 0 : index
    %c0_36 = arith.constant 0 : index
    %c0_37 = arith.constant 0 : index
    %103 = vector.load %arg6[%c0_35, %c0_36, %c0_37] : memref<1x8x32xf32, #tpu.memory_space<vmem>>, vector<1x8x32xf32>
    tpu.vector_store %arg6[%c0_35, %c0_36, %c0_37], %102 {strides = array<i32>} : memref<1x8x32xf32, #tpu.memory_space<vmem>>, vector<1x8x32xf32>,
    %cst_38 = arith.constant 2.500000e-01 : f32
    %104 = vector.broadcast %cst_38 : f32 to vector<1x8x8xf32>
    %105 = arith.mulf %94, %104 : vector<1x8x8xf32>
    %c0_39 = arith.constant 0 : index
    %c0_40 = arith.constant 0 : index
    %c0_41 = arith.constant 0 : index
    %106 = vector.load %arg7[%c0_39, %c0_40, %c0_41] : memref<1x8x8xf32, #tpu.memory_space<vmem>>, vector<1x8x8xf32>
    tpu.vector_store %arg7[%c0_39, %c0_40, %c0_41], %105 {strides = array<i32>} : memref<1x8x8xf32, #tpu.memory_space<vmem>>, vector<1x8x8xf32>,
    return
  }
  func.func @transform_0(%arg0: i32) -> (i32, i32, i32) {
    %c0_i32 = arith.constant 0 : i32
    %c0_i32_0 = arith.constant 0 : i32
    %c0_i32_1 = arith.constant 0 : i32
    return %arg0, %c0_i32, %c0_i32_0 : i32, i32, i32
  }
  func.func @transform_1(%arg0: i32) -> (i32, i32) {
    %c0_i32 = arith.constant 0 : i32
    %c0_i32_0 = arith.constant 0 : i32
    %c0_i32_1 = arith.constant 0 : i32
    return %c0_i32, %c0_i32_0 : i32, i32
  }
  func.func @transform_2(%arg0: i32) -> (i32, i32) {
    %c0_i32 = arith.constant 0 : i32
    %c0_i32_0 = arith.constant 0 : i32
    %c0_i32_1 = arith.constant 0 : i32
    return %c0_i32, %c0_i32_0 : i32, i32
  }
  func.func @transform_3(%arg0: i32) -> (i32, i32) {
    %c0_i32 = arith.constant 0 : i32
    %c0_i32_0 = arith.constant 0 : i32
    %c0_i32_1 = arith.constant 0 : i32
    return %c0_i32, %c0_i32_0 : i32, i32
  }
  func.func @transform_4(%arg0: i32) -> (i32, i32) {
    %c0_i32 = arith.constant 0 : i32
    %c0_i32_0 = arith.constant 0 : i32
    %c0_i32_1 = arith.constant 0 : i32
    return %c0_i32, %c0_i32_0 : i32, i32
  }
  func.func @transform_5(%arg0: i32) -> (i32, i32, i32) {
    %c0_i32 = arith.constant 0 : i32
    %c0_i32_0 = arith.constant 0 : i32
    %c0_i32_1 = arith.constant 0 : i32
    return %arg0, %c0_i32, %c0_i32_0 : i32, i32, i32
  }
  func.func @transform_6(%arg0: i32) -> (i32, i32, i32) {
    %c0_i32 = arith.constant 0 : i32
    %c0_i32_0 = arith.constant 0 : i32
    %c0_i32_1 = arith.constant 0 : i32
    return %arg0, %c0_i32, %c0_i32_0 : i32, i32, i32
  }
}

</mosaic_0001>

<llo_original>
// kernel: tpu_custom_call.1
$region0: #{tpu_custom_call.1}
  #allocation0 [shape = 'u32[]', space=smem, size = 0x4, offset = 0x4, fixed_abs, tag = 'smem constant byte address 0x4 - core index']
  #allocation1 [shape = 'u32[144,128]{1,0:T(1,128)}', space=vmem, size = 0x12000, scoped, tag = 'internal scratch']
  %s0 = inlined_call_operand.vmem [shape: f32[2,8,32], index: 0, kind: input, shape index: {}]
  %s1 = inlined_call_operand.vmem [shape: f32[32,192], index: 1, kind: input, shape index: {}]
  %s2 = inlined_call_operand.vmem [shape: f32[1,192], index: 2, kind: input, shape index: {}]
  %s3 = inlined_call_operand.vmem [shape: f32[64,32], index: 3, kind: input, shape index: {}]
  %s4 = inlined_call_operand.vmem [shape: f32[1,32], index: 4, kind: input, shape index: {}]
  %s5 = inlined_call_operand.hbm [shape: f32[2,8,32], index: 5, kind: output, shape index: {0}]
  %s6 = inlined_call_operand.hbm [shape: f32[2,8,8], index: 6, kind: output, shape index: {1}]
  %7 = xla_tuple %s5, %s6
  %s8 = sld [smem:[#allocation0]]
  $region61: #{tpu_custom_call.1} parent=0
    _
  %s10 = ssub.s32 1, %s8
  %s11 = scalar_select 0, %s10, %s8
  $region1: #{tpu_custom_call.1} parent=0
    #allocation2 [shape = 'u8[8192]{0}', space=vmem, size = 0x2000, scoped, tag = 'output window, operand 0']
    #allocation3 [shape = 's32[2]{0}', space=sflag, size = 0x8, scoped, tag = 'scoped memory for tpu_custom_call.1']
    #allocation4 [shape = 'u8[8192]{0}', space=vmem, size = 0x2000, scoped, tag = 'output window, operand 1']
    #allocation5 [shape = 's32[2]{0}', space=sflag, size = 0x8, scoped, tag = 'scoped memory for tpu_custom_call.1']
    %12 = vsyncpa [#allocation3], 0
    %s13 = scalar_lea.sflag [#allocation3], 1
    %14 = vsyncpa %s13, 0
    %15 = vsyncpa [#allocation5], 0
    %s16 = scalar_lea.sflag [#allocation5], 1
    %17 = vsyncpa %s16, 0
    loop: start=0, step=1, limit=4
    $region2: #{tpu_custom_call.1} parent=1 // loop_pre_header
      _
    $region3: #{tpu_custom_call.1} parent=1 // loop_header
      %s19 = sphi 0, %s23
      %p20 = scmp.ge.s32.totalorder %s19, 4
      %s29 = sphi 0, %s31
      %s32 = sphi 0, %s29
      %s33 = sphi 0, %s32
      %s49 = sphi 0, %s33
      %s53 = sphi 0, %s53
      %s55 = sphi 0, %s53
      %s56 = sphi 0, %s55
      %s70 = sphi 0, %s56
      %s74 = sphi 0, %s74
      %s76 = sphi 0, %s74
      %s77 = sphi 0, %s76
      %s91 = sphi 0, %s77
      %s95 = sphi 0, %s95
      %s97 = sphi 0, %s95
      %s98 = sphi 0, %s97
      %s112 = sphi 0, %s98
      %s116 = sphi 0, %s116
      %s118 = sphi 0, %s116
      %s119 = sphi 0, %s118
      %s133 = sphi 0, %s119
      %s139 = sphi 0, %s141
      %s142 = sphi 0, %s139
      %s143 = sphi 0, %s142
      %s159 = sphi 0, %s143
      %s165 = sphi 0, %s167
      %s168 = sphi 0, %s165
      %s169 = sphi 0, %s168
      %s185 = sphi 0, %s169
    $region4: #{tpu_custom_call.1} parent=1 // loop_header_branch
      %22 = sbr.rel (%p20) target = $region8
    $region5: #{tpu_custom_call.1} parent=1 // loop_body
      %s24 = ssub.s32 %s19, 1
      %s25 = ssub.s32 %s19, 2
      %s26 = sadd.s32 %s19, 1
      %s27 = ssub.s32 %s19, %s26
      %p28 = scmp.eq.s32.totalorder %s27, 0
      %s30 = sadd.s32 %s29, 1
      %s31 = scalar_select %p28, %s29, %s30
      %p34 = pneg %p28
      %p35 = scmp.eq.s32.totalorder %s19, 1
      %p36 = por %p34, %p35
      %p37 = scmp.ne.s32.totalorder %s29, %s32
      %p38 = scmp.eq.s32.totalorder %s19, 0
      %p39 = por %p37, %p38
      %p40 = scmp.ne.s32.totalorder %s29, %s32
      %p41 = scmp.eq.s32.totalorder %s24, 1
      %p42 = por %p40, %p41
      %p43 = scmp.ne.s32.totalorder %s32, %s33
      %p44 = scmp.eq.s32.totalorder %s24, 0
      %p45 = por %p43, %p44
      %p46 = scmp.ne.s32.totalorder %s32, %s33
      %p47 = scmp.eq.s32.totalorder %s25, 1
      %p48 = por %p46, %p47
      %p50 = scmp.ne.s32.totalorder %s33, %s49
      %p51 = scmp.eq.s32.totalorder %s25, 0
      %p52 = por %p50, %p51
      %s54 = sadd.s32 %s53, 1
      %p57 = scmp.eq.s32.totalorder %s19, 1
      %p58 = scmp.ne.s32.totalorder %s53, %s55
      %p59 = scmp.eq.s32.totalorder %s19, 0
      %p60 = por %p58, %p59
      %p61 = scmp.ne.s32.totalorder %s53, %s55
      %p62 = scmp.eq.s32.totalorder %s24, 1
      %p63 = por %p61, %p62
      %p64 = scmp.ne.s32.totalorder %s55, %s56
      %p65 = scmp.eq.s32.totalorder %s24, 0
      %p66 = por %p64, %p65
      %p67 = scmp.ne.s32.totalorder %s55, %s56
      %p68 = scmp.eq.s32.totalorder %s25, 1
      %p69 = por %p67, %p68
      %p71 = scmp.ne.s32.totalorder %s56, %s70
      %p72 = scmp.eq.s32.totalorder %s25, 0
      %p73 = por %p71, %p72
      %s75 = sadd.s32 %s74, 1
      %p78 = scmp.eq.s32.totalorder %s19, 1
      %p79 = scmp.ne.s32.totalorder %s74, %s76
      %p80 = scmp.eq.s32.totalorder %s19, 0
      %p81 = por %p79, %p80
      %p82 = scmp.ne.s32.totalorder %s74, %s76
      %p83 = scmp.eq.s32.totalorder %s24, 1
      %p84 = por %p82, %p83
      %p85 = scmp.ne.s32.totalorder %s76, %s77
      %p86 = scmp.eq.s32.totalorder %s24, 0
      %p87 = por %p85, %p86
      %p88 = scmp.ne.s32.totalorder %s76, %s77
      %p89 = scmp.eq.s32.totalorder %s25, 1
      %p90 = por %p88, %p89
      %p92 = scmp.ne.s32.totalorder %s77, %s91
      %p93 = scmp.eq.s32.totalorder %s25, 0
      %p94 = por %p92, %p93
      %s96 = sadd.s32 %s95, 1
      %p99 = scmp.eq.s32.totalorder %s19, 1
      %p100 = scmp.ne.s32.totalorder %s95, %s97
      %p101 = scmp.eq.s32.totalorder %s19, 0
      %p102 = por %p100, %p101
      %p103 = scmp.ne.s32.totalorder %s95, %s97
      %p104 = scmp.eq.s32.totalorder %s24, 1
      %p105 = por %p103, %p104
      %p106 = scmp.ne.s32.totalorder %s97, %s98
      %p107 = scmp.eq.s32.totalorder %s24, 0
      %p108 = por %p106, %p107
      %p109 = scmp.ne.s32.totalorder %s97, %s98
      %p110 = scmp.eq.s32.totalorder %s25, 1
      %p111 = por %p109, %p110
      %p113 = scmp.ne.s32.totalorder %s98, %s112
      %p114 = scmp.eq.s32.totalorder %s25, 0
      %p115 = por %p113, %p114
      %s117 = sadd.s32 %s116, 1
      %p120 = scmp.eq.s32.totalorder %s19, 1
      %p121 = scmp.ne.s32.totalorder %s116, %s118
      %p122 = scmp.eq.s32.totalorder %s19, 0
      %p123 = por %p121, %p122
      %p124 = scmp.ne.s32.totalorder %s116, %s118
      %p125 = scmp.eq.s32.totalorder %s24, 1
      %p126 = por %p124, %p125
      %p127 = scmp.ne.s32.totalorder %s118, %s119
      %p128 = scmp.eq.s32.totalorder %s24, 0
      %p129 = por %p127, %p128
      %p130 = scmp.ne.s32.totalorder %s118, %s119
      %p131 = scmp.eq.s32.totalorder %s25, 1
      %p132 = por %p130, %p131
      %p134 = scmp.ne.s32.totalorder %s119, %s133
      %p135 = scmp.eq.s32.totalorder %s25, 0
      %p136 = por %p134, %p135
      %s137 = ssub.s32 %s19, %s26
      %p138 = scmp.eq.s32.totalorder %s137, 0
      %s140 = sadd.s32 %s139, 1
      %s141 = scalar_select %p138, %s139, %s140
      %p144 = pneg %p138
      %p145 = scmp.eq.s32.totalorder %s19, 1
      %p146 = por %p144, %p145
      %p147 = scmp.ne.s32.totalorder %s139, %s142
      %p148 = scmp.eq.s32.totalorder %s19, 0
      %p149 = por %p147, %p148
      %p150 = scmp.ne.s32.totalorder %s139, %s142
      %p151 = scmp.eq.s32.totalorder %s24, 1
      %p152 = por %p150, %p151
      %p153 = scmp.ne.s32.totalorder %s142, %s143
      %p154 = scmp.eq.s32.totalorder %s24, 0
      %p155 = por %p153, %p154
      %p156 = scmp.ne.s32.totalorder %s142, %s143
      %p157 = scmp.eq.s32.totalorder %s25, 1
      %p158 = por %p156, %p157
      %p160 = scmp.ne.s32.totalorder %s143, %s159
      %p161 = scmp.eq.s32.totalorder %s25, 0
      %p162 = por %p160, %p161
      %s163 = ssub.s32 %s19, %s26
      %p164 = scmp.eq.s32.totalorder %s163, 0
      %s166 = sadd.s32 %s165, 1
      %s167 = scalar_select %p164, %s165, %s166
      %p170 = pneg %p164
      %p171 = scmp.eq.s32.totalorder %s19, 1
      %p172 = por %p170, %p171
      %p173 = scmp.ne.s32.totalorder %s165, %s168
      %p174 = scmp.eq.s32.totalorder %s19, 0
      %p175 = por %p173, %p174
      %p176 = scmp.ne.s32.totalorder %s165, %s168
      %p177 = scmp.eq.s32.totalorder %s24, 1
      %p178 = por %p176, %p177
      %p179 = scmp.ne.s32.totalorder %s168, %s169
      %p180 = scmp.eq.s32.totalorder %s24, 0
      %p181 = por %p179, %p180
      %p182 = scmp.ne.s32.totalorder %s168, %s169
      %p183 = scmp.eq.s32.totalorder %s25, 1
      %p184 = por %p182, %p183
      %p186 = scmp.ne.s32.totalorder %s169, %s185
      %p187 = scmp.eq.s32.totalorder %s25, 0
      %p188 = por %p186, %p187
      %p189 = scmp.le.s32.totalorder 1, %s19
      %p190 = scmp.lt.s32.totalorder %s19, 3
      %p191 = pnand %p189, %p190
      %p192 = pneg %p191
      // Predicated region
      $region9: #{tpu_custom_call.1} parent=5 // pred_check
        _
      $region10: #{tpu_custom_call.1} parent=5 // pred_check_branch
        %194 = sbr.rel (%p191) target = $region12
      $region11: #{tpu_custom_call.1} parent=5 // pred_region
        %s195 = ssub.s32 %s19, 1
        // Predicated region
        $region13: #{tpu_custom_call.1} parent=11 // pred_check
          %p196 = pneg %p66
        $region14: #{tpu_custom_call.1} parent=11 // pred_check_branch
          %198 = sbr.rel (%p196) target = $region16
        $region15: #{tpu_custom_call.1} parent=11 // pred_region
          _
        $region16: #{tpu_custom_call.1} parent=11 // pred_fallthru
          _
        // Predicated region
        $region17: #{tpu_custom_call.1} parent=11 // pred_check
          %p199 = pneg %p87
        $region18: #{tpu_custom_call.1} parent=11 // pred_check_branch
          %201 = sbr.rel (%p199) target = $region20
        $region19: #{tpu_custom_call.1} parent=11 // pred_region
          _
        $region20: #{tpu_custom_call.1} parent=11 // pred_fallthru
          _
        // Predicated region
        $region21: #{tpu_custom_call.1} parent=11 // pred_check
          %p202 = pneg %p108
        $region22: #{tpu_custom_call.1} parent=11 // pred_check_branch
          %204 = sbr.rel (%p202) target = $region24
        $region23: #{tpu_custom_call.1} parent=11 // pred_region
          _
        $region24: #{tpu_custom_call.1} parent=11 // pred_fallthru
          _
        // Predicated region
        $region25: #{tpu_custom_call.1} parent=11 // pred_check
          %p205 = pneg %p129
        $region26: #{tpu_custom_call.1} parent=11 // pred_check_branch
          %207 = sbr.rel (%p205) target = $region28
        $region27: #{tpu_custom_call.1} parent=11 // pred_region
          _
        $region28: #{tpu_custom_call.1} parent=11 // pred_fallthru
          _
      $region12: #{tpu_custom_call.1} parent=5 // pred_fallthru
        _
      %p208 = scmp.lt.s32.totalorder %s19, 2
      // Predicated region
      $region29: #{tpu_custom_call.1} parent=5 // pred_check
        %p209 = pneg %p208
      $region30: #{tpu_custom_call.1} parent=5 // pred_check_branch
        %211 = sbr.rel (%p209) target = $region32
      $region31: #{tpu_custom_call.1} parent=5 // pred_region
        // Predicated region
        $region33: #{tpu_custom_call.1} parent=31 // pred_check
          %p212 = pneg %p39
        $region34: #{tpu_custom_call.1} parent=31 // pred_check_branch
          %214 = sbr.rel (%p212) target = $region36
        $region35: #{tpu_custom_call.1} parent=31 // pred_region
          %p215 = scmp.lt.s32.totalorder %s19, 1
          %s216 = scalar_select %p215, %s19, 1
          %s217 = smul.addr %s216, 8
          %s218 = scalar_lea.vmem %s0, %s217
        $region36: #{tpu_custom_call.1} parent=31 // pred_fallthru
          _
      $region32: #{tpu_custom_call.1} parent=5 // pred_fallthru
        _
      %p219 = scmp.le.s32.totalorder 1, %s19
      %p220 = scmp.lt.s32.totalorder %s19, 3
      %p221 = pnand %p219, %p220
      %p222 = pneg %p221
      // Predicated region
      $region37: #{tpu_custom_call.1} parent=5 // pred_check
        _
      $region38: #{tpu_custom_call.1} parent=5 // pred_check_branch
        %224 = sbr.rel (%p221) target = $region40
      $region39: #{tpu_custom_call.1} parent=5 // pred_region
        %s225 = ssub.s32 %s19, 1
        %p226 = scmp.lt.s32.totalorder %s24, 1
        %s227 = scalar_select %p226, %s24, 1
        %s228 = smul.addr %s227, 8
        %s229 = scalar_lea.vmem %s0, %s228
        %p230 = pneg %p45
        %p231 = pneg %p42
        %p232 = pneg %p66
        %p233 = pneg %p63
        %p234 = pneg %p87
        %p235 = pneg %p84
        %p236 = pneg %p108
        %p237 = pneg %p105
        %p238 = pneg %p129
        %p239 = pneg %p126
        %p240 = pneg %p155
        %p241 = pneg %p152
        %s242 = sand.u32 %s142, 1
        %s243 = scalar_lea.sflag [#allocation3], %s242
        %s244 = sand.u32 %s142, 1
        %s245 = smul.addr %s244, 8
        %s246 = scalar_lea.vmem [#allocation2], %s245
        %p247 = pneg %p181
        %p248 = pneg %p178
        %s249 = sand.u32 %s168, 1
        %s250 = scalar_lea.sflag [#allocation5], %s249
        %s251 = sand.u32 %s168, 1
        %s252 = smul.addr %s251, 8
        %s253 = scalar_lea.vmem [#allocation4], %s252
        %p254 = scmp.lt.s32.totalorder %s24, 1
        %s255 = scalar_select %p254, %s24, 1
        %s256 = smul.addr %s255, 8
        %s257 = scalar_lea.vmem %s0, %s256
        %v258 = vld [vmem:[%s257] sm:$0xff]
        %v259 = vld [vmem:[%s1] sm:$0xff]
        %v260 = vld [vmem:[%s1 + $0x8] sm:$0xff]
        %v261 = vld [vmem:[%s1 + $0x10] sm:$0xff]
        %v262 = vld [vmem:[%s1 + $0x18] sm:$0xff]
        %v263 = vld [vmem:[%s1 + $0x20] sm:$0xff]
        %v264 = vld [vmem:[%s1 + $0x28] sm:$0xff]
        %v265 = vld [vmem:[%s1 + $0x30] sm:$0xff]
        %v266 = vld [vmem:[%s1 + $0x38] sm:$0xff]
        %v267 = vld [vmem:[%s2] sm:$0x3]
        %v269 = vlaneseq
        %v270 = vshrl.u32 %v269, 7
        %v271 = vsub.s32 0, %v270
        %v272 = vrot.slane %v267, %v271
        %v273 = vlaneseq
        %v274 = vshrl.u32 %v273, 7
        %v275 = vsub.s32 1, %v274
        %v276 = vrot.slane %v267, %v275
        %vm279 = vcmask 261120
        %v281 = vsel %vm279, %v258, 0
        %283 = vmatprep.subr.mxu0 %v260
        %284 = vmatpush1.msra.mxu0 %v259
        %285 = vmatprep.subr.mxu0 %v262
        %286 = vmatpush1.msra.mxu0 %v261
        %287 = vmatprep.subr.mxu0 %v264
        %288 = vmatpush1.msra.mxu0 %v263
        %289 = vmatprep.subr.mxu0 %v266
        %290 = vmatpush1.msra.mxu0 %v265
        %291 = vmatprep.subr.mxu0 0.0
        %292 = vmatpush1.msra.mxu0 0.0
        %293 = vmatprep.subr.mxu0 0.0
        %294 = vmatpush1.msra.mxu0 0.0
        %295 = vmatprep.subr.mxu0 0.0
        %296 = vmatpush1.msra.mxu0 0.0
        %297 = vmatprep.subr.mxu0 0.0
        %298 = vmatpush1.msra.mxu0 0.0
        %299 = vmatprep.subr.mxu0 0.0
        %300 = vmatpush1.msra.mxu0 0.0
        %301 = vmatprep.subr.mxu0 0.0
        %302 = vmatpush1.msra.mxu0 0.0
        %303 = vmatprep.subr.mxu0 0.0
        %304 = vmatpush1.msra.mxu0 0.0
        %305 = vmatprep.subr.mxu0 0.0
        %306 = vmatpush1.msra.mxu0 0.0
        %307 = vmatprep.subr.mxu0 0.0
        %308 = vmatpush1.msra.mxu0 0.0
        %309 = vmatprep.subr.mxu0 0.0
        %310 = vmatpush1.msra.mxu0 0.0
        %311 = vmatprep.subr.mxu0 0.0
        %312 = vmatpush1.msra.mxu0 0.0
        %313 = vmatprep.subr.mxu0 0.0
        %314 = vmatpush1.msra.mxu0 0.0
        %315 = vmatprep.subr.mxu0 0.0
        %316 = vmatpush1.msra.mxu0 0.0
        %317 = vmatprep.subr.mxu0 0.0
        %318 = vmatpush1.msra.mxu0 0.0
        %319 = vmatprep.subr.mxu0 0.0
        %320 = vmatpush1.msra.mxu0 0.0
        %321 = vmatprep.subr.mxu0 0.0
        %322 = vmatpush1.msra.mxu0 0.0
        %323 = vmatprep.subr.mxu0 0.0
        %324 = vmatpush1.msra.mxu0 0.0
        %325 = vmatprep.subr.mxu0 0.0
        %326 = vmatpush1.msra.mxu0 0.0
        %327 = vmatprep.subr.mxu0 0.0
        %328 = vmatpush1.msra.mxu0 0.0
        %329 = vmatprep.subr.mxu0 0.0
        %330 = vmatpush1.msra.mxu0 0.0
        %331 = vmatprep.subr.mxu0 0.0
        %332 = vmatpush1.msra.mxu0 0.0
        %333 = vmatprep.subr.mxu0 0.0
        %334 = vmatpush1.msra.mxu0 0.0
        %335 = vmatprep.subr.mxu0 0.0
        %336 = vmatpush1.msra.mxu0 0.0
        %337 = vmatprep.subr.mxu0 0.0
        %338 = vmatpush1.msra.mxu0 0.0
        %339 = vmatprep.subr.mxu0 0.0
        %340 = vmatpush1.msra.mxu0 0.0
        %341 = vmatprep.subr.mxu0 0.0
        %342 = vmatpush1.msra.mxu0 0.0
        %343 = vmatprep.subr.mxu0 0.0
        %344 = vmatpush1.msra.mxu0 0.0
        %345 = vmatprep.subr.mxu0 0.0
        %346 = vmatpush1.msra.mxu0 0.0
        %347 = vmatprep.mubr.f32.mxu0 0.0
        %348 = vmatmul.mubr.f32.gmra.mrb[0].mxu0 %v281
        %v349 = vpop.f32.mrb[0].mxu0
        %v350 = vadd.f32 %v272, %v349
        %v351 = vpop.f32.mrb[0].mxu0
        %v352 = vadd.f32 %v276, %v351
        %353 = vdwg.mxu0
        %355 = vrot.lane.b32.xlu0 %v350, 64
        %v356 = vpop.permute.xlu0 %355
        %vm357 = vcmask 130048
        %v358 = vsel %vm357, %v350, 0
        %v360 = vsel %vm357, %v356, 0
        %362 = vmatprep.subr.mxu0 0.0
        %363 = vmatpush1.xpose.msra.mxu0 %v360
        %364 = vmatprep.subr.mxu0 0.0
        %365 = vmatpush1.xpose.msra.mxu0 0.0
        %366 = vmatprep.subr.mxu0 0.0
        %367 = vmatpush1.xpose.msra.mxu0 0.0
        %368 = vmatprep.subr.mxu0 0.0
        %369 = vmatpush1.xpose.msra.mxu0 0.0
        %370 = vmatprep.subr.mxu0 0.0
        %371 = vmatpush1.xpose.msra.mxu0 0.0
        %372 = vmatprep.subr.mxu0 0.0
        %373 = vmatpush1.xpose.msra.mxu0 0.0
        %374 = vmatprep.subr.mxu0 0.0
        %375 = vmatpush1.xpose.msra.mxu0 0.0
        %376 = vmatprep.subr.mxu0 0.0
        %377 = vmatpush1.xpose.msra.mxu0 0.0
        %378 = vmatprep.subr.mxu0 0.0
        %379 = vmatpush1.xpose.msra.mxu0 0.0
        %380 = vmatprep.subr.mxu0 0.0
        %381 = vmatpush1.xpose.msra.mxu0 0.0
        %382 = vmatprep.subr.mxu0 0.0
        %383 = vmatpush1.xpose.msra.mxu0 0.0
        %384 = vmatprep.subr.mxu0 0.0
        %385 = vmatpush1.xpose.msra.mxu0 0.0
        %386 = vmatprep.subr.mxu0 0.0
        %387 = vmatpush1.xpose.msra.mxu0 0.0
        %388 = vmatprep.subr.mxu0 0.0
        %389 = vmatpush1.xpose.msra.mxu0 0.0
        %390 = vmatprep.subr.mxu0 0.0
        %391 = vmatpush1.xpose.msra.mxu0 0.0
        %392 = vmatprep.subr.mxu0 0.0
        %393 = vmatpush1.xpose.msra.mxu0 0.0
        %394 = vmatprep.subr.mxu0 0.0
        %395 = vmatpush1.xpose.msra.mxu0 0.0
        %396 = vmatprep.subr.mxu0 0.0
        %397 = vmatpush1.xpose.msra.mxu0 0.0
        %398 = vmatprep.subr.mxu0 0.0
        %399 = vmatpush1.xpose.msra.mxu0 0.0
        %400 = vmatprep.subr.mxu0 0.0
        %401 = vmatpush1.xpose.msra.mxu0 0.0
        %402 = vmatprep.subr.mxu0 0.0
        %403 = vmatpush1.xpose.msra.mxu0 0.0
        %404 = vmatprep.subr.mxu0 0.0
        %405 = vmatpush1.xpose.msra.mxu0 0.0
        %406 = vmatprep.subr.mxu0 0.0
        %407 = vmatpush1.xpose.msra.mxu0 0.0
        %408 = vmatprep.subr.mxu0 0.0
        %409 = vmatpush1.xpose.msra.mxu0 0.0
        %410 = vmatprep.subr.mxu0 0.0
        %411 = vmatpush1.xpose.msra.mxu0 0.0
        %412 = vmatprep.subr.mxu0 0.0
        %413 = vmatpush1.xpose.msra.mxu0 0.0
        %414 = vmatprep.subr.mxu0 0.0
        %415 = vmatpush1.xpose.msra.mxu0 0.0
        %416 = vmatprep.subr.mxu0 0.0
        %417 = vmatpush1.xpose.msra.mxu0 0.0
        %418 = vmatprep.subr.mxu0 0.0
        %419 = vmatpush1.xpose.msra.mxu0 0.0
        %420 = vmatprep.subr.mxu0 0.0
        %421 = vmatpush1.xpose.msra.mxu0 0.0
        %422 = vmatprep.subr.mxu0 0.0
        %423 = vmatpush1.xpose.msra.mxu0 0.0
        %424 = vmatprep.subr.mxu0 0.0
        %425 = vmatpush1.xpose.msra.mxu0 0.0
        %426 = vmatprep.mubr.f32.mxu0 0.0
        %427 = vmatmul.mubr.f32.gmra.mrb[0].mxu0 %v358
        %v428 = vpop.f32.mrb[0].mxu0
        %v429 = vadd.f32 0.0, %v428
        %v430 = vpop.f32.mrb[0].mxu0
        %431 = vdwg.mxu0
        %v432 = vmul.f32 %v429, 0.25
        %vm433 = vcmask 64512
        %v434 = vsel %vm433, %v432, -inf
        %435 = vmax.xlane.f32.xlu0 %v434
        %v436 = vpop.xlane.xlu0 %435
        %v437 = vsub.f32 %v432, %v436
        %v438 = vmul.f32 %v437, 1.442695
        %v439 = vpow.pop %v438
        %v440 = vsel %vm433, %v439, 0.0
        %441 = vadd.xlane.f32.xlu0 %v440
        %v442 = vpop.xlane.xlu0 %441
        %v443 = vrcp.pop %v442
        %v444 = vmul.f32 %v442, %v443
        %v445 = vsub.f32 2.0, %v444
        %v446 = vmul.f32 %v443, %v445
        %v447 = vmul.f32 %v439, %v446
        %v449 = vsel %vm433, %v447, 0
        %451 = vmatprep.subr.mxu0 0.0
        %452 = vmatpush1.msra.mxu0 %v352
        %453 = vmatprep.subr.mxu0 0.0
        %454 = vmatpush1.msra.mxu0 0.0
        %455 = vmatprep.subr.mxu0 0.0
        %456 = vmatpush1.msra.mxu0 0.0
        %457 = vmatprep.subr.mxu0 0.0
        %458 = vmatpush1.msra.mxu0 0.0
        %459 = vmatprep.subr.mxu0 0.0
        %460 = vmatpush1.msra.mxu0 0.0
        %461 = vmatprep.subr.mxu0 0.0
        %462 = vmatpush1.msra.mxu0 0.0
        %463 = vmatprep.subr.mxu0 0.0
        %464 = vmatpush1.msra.mxu0 0.0
        %465 = vmatprep.subr.mxu0 0.0
        %466 = vmatpush1.msra.mxu0 0.0
        %467 = vmatprep.subr.mxu0 0.0
        %468 = vmatpush1.msra.mxu0 0.0
        %469 = vmatprep.subr.mxu0 0.0
        %470 = vmatpush1.msra.mxu0 0.0
        %471 = vmatprep.subr.mxu0 0.0
        %472 = vmatpush1.msra.mxu0 0.0
        %473 = vmatprep.subr.mxu0 0.0
        %474 = vmatpush1.msra.mxu0 0.0
        %475 = vmatprep.subr.mxu0 0.0
        %476 = vmatpush1.msra.mxu0 0.0
        %477 = vmatprep.subr.mxu0 0.0
        %478 = vmatpush1.msra.mxu0 0.0
        %479 = vmatprep.subr.mxu0 0.0
        %480 = vmatpush1.msra.mxu0 0.0
        %481 = vmatprep.subr.mxu0 0.0
        %482 = vmatpush1.msra.mxu0 0.0
        %483 = vmatprep.subr.mxu0 0.0
        %484 = vmatpush1.msra.mxu0 0.0
        %485 = vmatprep.subr.mxu0 0.0
        %486 = vmatpush1.msra.mxu0 0.0
        %487 = vmatprep.subr.mxu0 0.0
        %488 = vmatpush1.msra.mxu0 0.0
        %489 = vmatprep.subr.mxu0 0.0
        %490 = vmatpush1.msra.mxu0 0.0
        %491 = vmatprep.subr.mxu0 0.0
        %492 = vmatpush1.msra.mxu0 0.0
        %493 = vmatprep.subr.mxu0 0.0
        %494 = vmatpush1.msra.mxu0 0.0
        %495 = vmatprep.subr.mxu0 0.0
        %496 = vmatpush1.msra.mxu0 0.0
        %497 = vmatprep.subr.mxu0 0.0
        %498 = vmatpush1.msra.mxu0 0.0
        %499 = vmatprep.subr.mxu0 0.0
        %500 = vmatpush1.msra.mxu0 0.0
        %501 = vmatprep.subr.mxu0 0.0
        %502 = vmatpush1.msra.mxu0 0.0
        %503 = vmatprep.subr.mxu0 0.0
        %504 = vmatpush1.msra.mxu0 0.0
        %505 = vmatprep.subr.mxu0 0.0
        %506 = vmatpush1.msra.mxu0 0.0
        %507 = vmatprep.subr.mxu0 0.0
        %508 = vmatpush1.msra.mxu0 0.0
        %509 = vmatprep.subr.mxu0 0.0
        %510 = vmatpush1.msra.mxu0 0.0
        %511 = vmatprep.subr.mxu0 0.0
        %512 = vmatpush1.msra.mxu0 0.0
        %513 = vmatprep.subr.mxu0 0.0
        %514 = vmatpush1.msra.mxu0 0.0
        %515 = vmatprep.mubr.f32.mxu0 0.0
        %516 = vmatmul.mubr.f32.gmra.mrb[0].mxu0 %v449
        %v517 = vpop.f32.mrb[0].mxu0
        %v518 = vadd.f32 0.0, %v517
        %v519 = vpop.f32.mrb[0].mxu0
        %520 = vdwg.mxu0
        %521 = vrot.lane.b32.xlu0 %v350, 112
        %v522 = vpop.permute.xlu0 %521
        %523 = vrot.lane.b32.xlu0 %v350, 48
        %v524 = vpop.permute.xlu0 %523
        %v525 = vsel %vm357, %v522, 0
        %v527 = vsel %vm357, %v524, 0
        %529 = vmatprep.subr.mxu0 0.0
        %530 = vmatpush1.xpose.msra.mxu0 %v527
        %531 = vmatprep.subr.mxu0 0.0
        %532 = vmatpush1.xpose.msra.mxu0 0.0
        %533 = vmatprep.subr.mxu0 0.0
        %534 = vmatpush1.xpose.msra.mxu0 0.0
        %535 = vmatprep.subr.mxu0 0.0
        %536 = vmatpush1.xpose.msra.mxu0 0.0
        %537 = vmatprep.subr.mxu0 0.0
        %538 = vmatpush1.xpose.msra.mxu0 0.0
        %539 = vmatprep.subr.mxu0 0.0
        %540 = vmatpush1.xpose.msra.mxu0 0.0
        %541 = vmatprep.subr.mxu0 0.0
        %542 = vmatpush1.xpose.msra.mxu0 0.0
        %543 = vmatprep.subr.mxu0 0.0
        %544 = vmatpush1.xpose.msra.mxu0 0.0
        %545 = vmatprep.subr.mxu0 0.0
        %546 = vmatpush1.xpose.msra.mxu0 0.0
        %547 = vmatprep.subr.mxu0 0.0
        %548 = vmatpush1.xpose.msra.mxu0 0.0
        %549 = vmatprep.subr.mxu0 0.0
        %550 = vmatpush1.xpose.msra.mxu0 0.0
        %551 = vmatprep.subr.mxu0 0.0
        %552 = vmatpush1.xpose.msra.mxu0 0.0
        %553 = vmatprep.subr.mxu0 0.0
        %554 = vmatpush1.xpose.msra.mxu0 0.0
        %555 = vmatprep.subr.mxu0 0.0
        %556 = vmatpush1.xpose.msra.mxu0 0.0
        %557 = vmatprep.subr.mxu0 0.0
        %558 = vmatpush1.xpose.msra.mxu0 0.0
        %559 = vmatprep.subr.mxu0 0.0
        %560 = vmatpush1.xpose.msra.mxu0 0.0
        %561 = vmatprep.subr.mxu0 0.0
        %562 = vmatpush1.xpose.msra.mxu0 0.0
        %563 = vmatprep.subr.mxu0 0.0
        %564 = vmatpush1.xpose.msra.mxu0 0.0
        %565 = vmatprep.subr.mxu0 0.0
        %566 = vmatpush1.xpose.msra.mxu0 0.0
        %567 = vmatprep.subr.mxu0 0.0
        %568 = vmatpush1.xpose.msra.mxu0 0.0
        %569 = vmatprep.subr.mxu0 0.0
        %570 = vmatpush1.xpose.msra.mxu0 0.0
        %571 = vmatprep.subr.mxu0 0.0
        %572 = vmatpush1.xpose.msra.mxu0 0.0
        %573 = vmatprep.subr.mxu0 0.0
        %574 = vmatpush1.xpose.msra.mxu0 0.0
        %575 = vmatprep.subr.mxu0 0.0
        %576 = vmatpush1.xpose.msra.mxu0 0.0
        %577 = vmatprep.subr.mxu0 0.0
        %578 = vmatpush1.xpose.msra.mxu0 0.0
        %579 = vmatprep.subr.mxu0 0.0
        %580 = vmatpush1.xpose.msra.mxu0 0.0
        %581 = vmatprep.subr.mxu0 0.0
        %582 = vmatpush1.xpose.msra.mxu0 0.0
        %583 = vmatprep.subr.mxu0 0.0
        %584 = vmatpush1.xpose.msra.mxu0 0.0
        %585 = vmatprep.subr.mxu0 0.0
        %586 = vmatpush1.xpose.msra.mxu0 0.0
        %587 = vmatprep.subr.mxu0 0.0
        %588 = vmatpush1.xpose.msra.mxu0 0.0
        %589 = vmatprep.subr.mxu0 0.0
        %590 = vmatpush1.xpose.msra.mxu0 0.0
        %591 = vmatprep.subr.mxu0 0.0
        %592 = vmatpush1.xpose.msra.mxu0 0.0
        %593 = vmatprep.mubr.f32.mxu0 0.0
        %594 = vmatmul.mubr.f32.gmra.mrb[0].mxu0 %v525
        %v595 = vpop.f32.mrb[0].mxu0
        %v596 = vadd.f32 0.0, %v595
        %v597 = vpop.f32.mrb[0].mxu0
        %598 = vdwg.mxu0
        %v599 = vmul.f32 %v596, 0.25
        %v600 = vsel %vm433, %v599, -inf
        %601 = vmax.xlane.f32.xlu0 %v600
        %v602 = vpop.xlane.xlu0 %601
        %v603 = vsub.f32 %v599, %v602
        %v604 = vmul.f32 %v603, 1.442695
        %v605 = vpow.pop %v604
        %v606 = vsel %vm433, %v605, 0.0
        %607 = vadd.xlane.f32.xlu0 %v606
        %v608 = vpop.xlane.xlu0 %607
        %v609 = vrcp.pop %v608
        %v610 = vmul.f32 %v608, %v609
        %v611 = vsub.f32 2.0, %v610
        %v612 = vmul.f32 %v609, %v611
        %v613 = vmul.f32 %v605, %v612
        %615 = vrot.lane.b32.xlu0 %v352, 112
        %v616 = vpop.permute.xlu0 %615
        %v619 = vsel %vm433, %v613, 0
        %621 = vmatprep.subr.mxu0 0.0
        %622 = vmatpush1.msra.mxu0 %v616
        %623 = vmatprep.subr.mxu0 0.0
        %624 = vmatpush1.msra.mxu0 0.0
        %625 = vmatprep.subr.mxu0 0.0
        %626 = vmatpush1.msra.mxu0 0.0
        %627 = vmatprep.subr.mxu0 0.0
        %628 = vmatpush1.msra.mxu0 0.0
        %629 = vmatprep.subr.mxu0 0.0
        %630 = vmatpush1.msra.mxu0 0.0
        %631 = vmatprep.subr.mxu0 0.0
        %632 = vmatpush1.msra.mxu0 0.0
        %633 = vmatprep.subr.mxu0 0.0
        %634 = vmatpush1.msra.mxu0 0.0
        %635 = vmatprep.subr.mxu0 0.0
        %636 = vmatpush1.msra.mxu0 0.0
        %637 = vmatprep.subr.mxu0 0.0
        %638 = vmatpush1.msra.mxu0 0.0
        %639 = vmatprep.subr.mxu0 0.0
        %640 = vmatpush1.msra.mxu0 0.0
        %641 = vmatprep.subr.mxu0 0.0
        %642 = vmatpush1.msra.mxu0 0.0
        %643 = vmatprep.subr.mxu0 0.0
        %644 = vmatpush1.msra.mxu0 0.0
        %645 = vmatprep.subr.mxu0 0.0
        %646 = vmatpush1.msra.mxu0 0.0
        %647 = vmatprep.subr.mxu0 0.0
        %648 = vmatpush1.msra.mxu0 0.0
        %649 = vmatprep.subr.mxu0 0.0
        %650 = vmatpush1.msra.mxu0 0.0
        %651 = vmatprep.subr.mxu0 0.0
        %652 = vmatpush1.msra.mxu0 0.0
        %653 = vmatprep.subr.mxu0 0.0
        %654 = vmatpush1.msra.mxu0 0.0
        %655 = vmatprep.subr.mxu0 0.0
        %656 = vmatpush1.msra.mxu0 0.0
        %657 = vmatprep.subr.mxu0 0.0
        %658 = vmatpush1.msra.mxu0 0.0
        %659 = vmatprep.subr.mxu0 0.0
        %660 = vmatpush1.msra.mxu0 0.0
        %661 = vmatprep.subr.mxu0 0.0
        %662 = vmatpush1.msra.mxu0 0.0
        %663 = vmatprep.subr.mxu0 0.0
        %664 = vmatpush1.msra.mxu0 0.0
        %665 = vmatprep.subr.mxu0 0.0
        %666 = vmatpush1.msra.mxu0 0.0
        %667 = vmatprep.subr.mxu0 0.0
        %668 = vmatpush1.msra.mxu0 0.0
        %669 = vmatprep.subr.mxu0 0.0
        %670 = vmatpush1.msra.mxu0 0.0
        %671 = vmatprep.subr.mxu0 0.0
        %672 = vmatpush1.msra.mxu0 0.0
        %673 = vmatprep.subr.mxu0 0.0
        %674 = vmatpush1.msra.mxu0 0.0
        %675 = vmatprep.subr.mxu0 0.0
        %676 = vmatpush1.msra.mxu0 0.0
        %677 = vmatprep.subr.mxu0 0.0
        %678 = vmatpush1.msra.mxu0 0.0
        %679 = vmatprep.subr.mxu0 0.0
        %680 = vmatpush1.msra.mxu0 0.0
        %681 = vmatprep.subr.mxu0 0.0
        %682 = vmatpush1.msra.mxu0 0.0
        %683 = vmatprep.subr.mxu0 0.0
        %684 = vmatpush1.msra.mxu0 0.0
        %685 = vmatprep.mubr.f32.mxu0 0.0
        %686 = vmatmul.mubr.f32.gmra.mrb[0].mxu0 %v619
        %v687 = vpop.f32.mrb[0].mxu0
        %v688 = vadd.f32 0.0, %v687
        %v689 = vpop.f32.mrb[0].mxu0
        %690 = vdwg.mxu0
        %v691 = vadd.f32 %v447, %v613
        %692 = vrot.lane.b32.xlu0 %v350, 96
        %v693 = vpop.permute.xlu0 %692
        %694 = vrot.lane.b32.xlu0 %v350, 32
        %v695 = vpop.permute.xlu0 %694
        %v696 = vsel %vm357, %v693, 0
        %v698 = vsel %vm357, %v695, 0
        %700 = vmatprep.subr.mxu0 0.0
        %701 = vmatpush1.xpose.msra.mxu0 %v698
        %702 = vmatprep.subr.mxu0 0.0
        %703 = vmatpush1.xpose.msra.mxu0 0.0
        %704 = vmatprep.subr.mxu0 0.0
        %705 = vmatpush1.xpose.msra.mxu0 0.0
        %706 = vmatprep.subr.mxu0 0.0
        %707 = vmatpush1.xpose.msra.mxu0 0.0
        %708 = vmatprep.subr.mxu0 0.0
        %709 = vmatpush1.xpose.msra.mxu0 0.0
        %710 = vmatprep.subr.mxu0 0.0
        %711 = vmatpush1.xpose.msra.mxu0 0.0
        %712 = vmatprep.subr.mxu0 0.0
        %713 = vmatpush1.xpose.msra.mxu0 0.0
        %714 = vmatprep.subr.mxu0 0.0
        %715 = vmatpush1.xpose.msra.mxu0 0.0
        %716 = vmatprep.subr.mxu0 0.0
        %717 = vmatpush1.xpose.msra.mxu0 0.0
        %718 = vmatprep.subr.mxu0 0.0
        %719 = vmatpush1.xpose.msra.mxu0 0.0
        %720 = vmatprep.subr.mxu0 0.0
        %721 = vmatpush1.xpose.msra.mxu0 0.0
        %722 = vmatprep.subr.mxu0 0.0
        %723 = vmatpush1.xpose.msra.mxu0 0.0
        %724 = vmatprep.subr.mxu0 0.0
        %725 = vmatpush1.xpose.msra.mxu0 0.0
        %726 = vmatprep.subr.mxu0 0.0
        %727 = vmatpush1.xpose.msra.mxu0 0.0
        %728 = vmatprep.subr.mxu0 0.0
        %729 = vmatpush1.xpose.msra.mxu0 0.0
        %730 = vmatprep.subr.mxu0 0.0
        %731 = vmatpush1.xpose.msra.mxu0 0.0
        %732 = vmatprep.subr.mxu0 0.0
        %733 = vmatpush1.xpose.msra.mxu0 0.0
        %734 = vmatprep.subr.mxu0 0.0
        %735 = vmatpush1.xpose.msra.mxu0 0.0
        %736 = vmatprep.subr.mxu0 0.0
        %737 = vmatpush1.xpose.msra.mxu0 0.0
        %738 = vmatprep.subr.mxu0 0.0
        %739 = vmatpush1.xpose.msra.mxu0 0.0
        %740 = vmatprep.subr.mxu0 0.0
        %741 = vmatpush1.xpose.msra.mxu0 0.0
        %742 = vmatprep.subr.mxu0 0.0
        %743 = vmatpush1.xpose.msra.mxu0 0.0
        %744 = vmatprep.subr.mxu0 0.0
        %745 = vmatpush1.xpose.msra.mxu0 0.0
        %746 = vmatprep.subr.mxu0 0.0
        %747 = vmatpush1.xpose.msra.mxu0 0.0
        %748 = vmatprep.subr.mxu0 0.0
        %749 = vmatpush1.xpose.msra.mxu0 0.0
        %750 = vmatprep.subr.mxu0 0.0
        %751 = vmatpush1.xpose.msra.mxu0 0.0
        %752 = vmatprep.subr.mxu0 0.0
        %753 = vmatpush1.xpose.msra.mxu0 0.0
        %754 = vmatprep.subr.mxu0 0.0
        %755 = vmatpush1.xpose.msra.mxu0 0.0
        %756 = vmatprep.subr.mxu0 0.0
        %757 = vmatpush1.xpose.msra.mxu0 0.0
        %758 = vmatprep.subr.mxu0 0.0
        %759 = vmatpush1.xpose.msra.mxu0 0.0
        %760 = vmatprep.subr.mxu0 0.0
        %761 = vmatpush1.xpose.msra.mxu0 0.0
        %762 = vmatprep.subr.mxu0 0.0
        %763 = vmatpush1.xpose.msra.mxu0 0.0
        %764 = vmatprep.mubr.f32.mxu0 0.0
        %765 = vmatmul.mubr.f32.gmra.mrb[0].mxu0 %v696
        %v766 = vpop.f32.mrb[0].mxu0
        %v767 = vadd.f32 0.0, %v766
        %v768 = vpop.f32.mrb[0].mxu0
        %769 = vdwg.mxu0
        %v770 = vmul.f32 %v767, 0.25
        %v771 = vsel %vm433, %v770, -inf
        %772 = vmax.xlane.f32.xlu0 %v771
        %v773 = vpop.xlane.xlu0 %772
        %v774 = vsub.f32 %v770, %v773
        %v775 = vmul.f32 %v774, 1.442695
        %v776 = vpow.pop %v775
        %v777 = vsel %vm433, %v776, 0.0
        %778 = vadd.xlane.f32.xlu0 %v777
        %v779 = vpop.xlane.xlu0 %778
        %v780 = vrcp.pop %v779
        %v781 = vmul.f32 %v779, %v780
        %v782 = vsub.f32 2.0, %v781
        %v783 = vmul.f32 %v780, %v782
        %v784 = vmul.f32 %v776, %v783
        %785 = vrot.lane.b32.xlu0 %v352, 96
        %v786 = vpop.permute.xlu0 %785
        %v789 = vsel %vm433, %v784, 0
        %791 = vmatprep.subr.mxu0 0.0
        %792 = vmatpush1.msra.mxu0 %v786
        %793 = vmatprep.subr.mxu0 0.0
        %794 = vmatpush1.msra.mxu0 0.0
        %795 = vmatprep.subr.mxu0 0.0
        %796 = vmatpush1.msra.mxu0 0.0
        %797 = vmatprep.subr.mxu0 0.0
        %798 = vmatpush1.msra.mxu0 0.0
        %799 = vmatprep.subr.mxu0 0.0
        %800 = vmatpush1.msra.mxu0 0.0
        %801 = vmatprep.subr.mxu0 0.0
        %802 = vmatpush1.msra.mxu0 0.0
        %803 = vmatprep.subr.mxu0 0.0
        %804 = vmatpush1.msra.mxu0 0.0
        %805 = vmatprep.subr.mxu0 0.0
        %806 = vmatpush1.msra.mxu0 0.0
        %807 = vmatprep.subr.mxu0 0.0
        %808 = vmatpush1.msra.mxu0 0.0
        %809 = vmatprep.subr.mxu0 0.0
        %810 = vmatpush1.msra.mxu0 0.0
        %811 = vmatprep.subr.mxu0 0.0
        %812 = vmatpush1.msra.mxu0 0.0
        %813 = vmatprep.subr.mxu0 0.0
        %814 = vmatpush1.msra.mxu0 0.0
        %815 = vmatprep.subr.mxu0 0.0
        %816 = vmatpush1.msra.mxu0 0.0
        %817 = vmatprep.subr.mxu0 0.0
        %818 = vmatpush1.msra.mxu0 0.0
        %819 = vmatprep.subr.mxu0 0.0
        %820 = vmatpush1.msra.mxu0 0.0
        %821 = vmatprep.subr.mxu0 0.0
        %822 = vmatpush1.msra.mxu0 0.0
        %823 = vmatprep.subr.mxu0 0.0
        %824 = vmatpush1.msra.mxu0 0.0
        %825 = vmatprep.subr.mxu0 0.0
        %826 = vmatpush1.msra.mxu0 0.0
        %827 = vmatprep.subr.mxu0 0.0
        %828 = vmatpush1.msra.mxu0 0.0
        %829 = vmatprep.subr.mxu0 0.0
        %830 = vmatpush1.msra.mxu0 0.0
        %831 = vmatprep.subr.mxu0 0.0
        %832 = vmatpush1.msra.mxu0 0.0
        %833 = vmatprep.subr.mxu0 0.0
        %834 = vmatpush1.msra.mxu0 0.0
        %835 = vmatprep.subr.mxu0 0.0
        %836 = vmatpush1.msra.mxu0 0.0
        %837 = vmatprep.subr.mxu0 0.0
        %838 = vmatpush1.msra.mxu0 0.0
        %839 = vmatprep.subr.mxu0 0.0
        %840 = vmatpush1.msra.mxu0 0.0
        %841 = vmatprep.subr.mxu0 0.0
        %842 = vmatpush1.msra.mxu0 0.0
        %843 = vmatprep.subr.mxu0 0.0
        %844 = vmatpush1.msra.mxu0 0.0
        %845 = vmatprep.subr.mxu0 0.0
        %846 = vmatpush1.msra.mxu0 0.0
        %847 = vmatprep.subr.mxu0 0.0
        %848 = vmatpush1.msra.mxu0 0.0
        %849 = vmatprep.subr.mxu0 0.0
        %850 = vmatpush1.msra.mxu0 0.0
        %851 = vmatprep.subr.mxu0 0.0
        %852 = vmatpush1.msra.mxu0 0.0
        %853 = vmatprep.subr.mxu0 0.0
        %854 = vmatpush1.msra.mxu0 0.0
        %855 = vmatprep.mubr.f32.mxu0 0.0
        %856 = vmatmul.mubr.f32.gmra.mrb[0].mxu0 %v789
        %v857 = vpop.f32.mrb[0].mxu0
        %v858 = vadd.f32 0.0, %v857
        %v859 = vpop.f32.mrb[0].mxu0
        %860 = vdwg.mxu0
        %v861 = vadd.f32 %v691, %v784
        %862 = vrot.lane.b32.xlu0 %v350, 80
        %v863 = vpop.permute.xlu0 %862
        %864 = vrot.lane.b32.xlu0 %v350, 16
        %v865 = vpop.permute.xlu0 %864
        %v866 = vsel %vm357, %v863, 0
        %v868 = vsel %vm357, %v865, 0
        %870 = vmatprep.subr.mxu0 0.0
        %871 = vmatpush1.xpose.msra.mxu0 %v868
        %872 = vmatprep.subr.mxu0 0.0
        %873 = vmatpush1.xpose.msra.mxu0 0.0
        %874 = vmatprep.subr.mxu0 0.0
        %875 = vmatpush1.xpose.msra.mxu0 0.0
        %876 = vmatprep.subr.mxu0 0.0
        %877 = vmatpush1.xpose.msra.mxu0 0.0
        %878 = vmatprep.subr.mxu0 0.0
        %879 = vmatpush1.xpose.msra.mxu0 0.0
        %880 = vmatprep.subr.mxu0 0.0
        %881 = vmatpush1.xpose.msra.mxu0 0.0
        %882 = vmatprep.subr.mxu0 0.0
        %883 = vmatpush1.xpose.msra.mxu0 0.0
        %884 = vmatprep.subr.mxu0 0.0
        %885 = vmatpush1.xpose.msra.mxu0 0.0
        %886 = vmatprep.subr.mxu0 0.0
        %887 = vmatpush1.xpose.msra.mxu0 0.0
        %888 = vmatprep.subr.mxu0 0.0
        %889 = vmatpush1.xpose.msra.mxu0 0.0
        %890 = vmatprep.subr.mxu0 0.0
        %891 = vmatpush1.xpose.msra.mxu0 0.0
        %892 = vmatprep.subr.mxu0 0.0
        %893 = vmatpush1.xpose.msra.mxu0 0.0
        %894 = vmatprep.subr.mxu0 0.0
        %895 = vmatpush1.xpose.msra.mxu0 0.0
        %896 = vmatprep.subr.mxu0 0.0
        %897 = vmatpush1.xpose.msra.mxu0 0.0
        %898 = vmatprep.subr.mxu0 0.0
        %899 = vmatpush1.xpose.msra.mxu0 0.0
        %900 = vmatprep.subr.mxu0 0.0
        %901 = vmatpush1.xpose.msra.mxu0 0.0
        %902 = vmatprep.subr.mxu0 0.0
        %903 = vmatpush1.xpose.msra.mxu0 0.0
        %904 = vmatprep.subr.mxu0 0.0
        %905 = vmatpush1.xpose.msra.mxu0 0.0
        %906 = vmatprep.subr.mxu0 0.0
        %907 = vmatpush1.xpose.msra.mxu0 0.0
        %908 = vmatprep.subr.mxu0 0.0
        %909 = vmatpush1.xpose.msra.mxu0 0.0
        %910 = vmatprep.subr.mxu0 0.0
        %911 = vmatpush1.xpose.msra.mxu0 0.0
        %912 = vmatprep.subr.mxu0 0.0
        %913 = vmatpush1.xpose.msra.mxu0 0.0
        %914 = vmatprep.subr.mxu0 0.0
        %915 = vmatpush1.xpose.msra.mxu0 0.0
        %916 = vmatprep.subr.mxu0 0.0
        %917 = vmatpush1.xpose.msra.mxu0 0.0
        %918 = vmatprep.subr.mxu0 0.0
        %919 = vmatpush1.xpose.msra.mxu0 0.0
        %920 = vmatprep.subr.mxu0 0.0
        %921 = vmatpush1.xpose.msra.mxu0 0.0
        %922 = vmatprep.subr.mxu0 0.0
        %923 = vmatpush1.xpose.msra.mxu0 0.0
        %924 = vmatprep.subr.mxu0 0.0
        %925 = vmatpush1.xpose.msra.mxu0 0.0
        %926 = vmatprep.subr.mxu0 0.0
        %927 = vmatpush1.xpose.msra.mxu0 0.0
        %928 = vmatprep.subr.mxu0 0.0
        %929 = vmatpush1.xpose.msra.mxu0 0.0
        %930 = vmatprep.subr.mxu0 0.0
        %931 = vmatpush1.xpose.msra.mxu0 0.0
        %932 = vmatprep.subr.mxu0 0.0
        %933 = vmatpush1.xpose.msra.mxu0 0.0
        %934 = vmatprep.mubr.f32.mxu0 0.0
        %935 = vmatmul.mubr.f32.gmra.mrb[0].mxu0 %v866
        %v936 = vpop.f32.mrb[0].mxu0
        %v937 = vadd.f32 0.0, %v936
        %v938 = vpop.f32.mrb[0].mxu0
        %939 = vdwg.mxu0
        %v940 = vmul.f32 %v937, 0.25
        %v941 = vsel %vm433, %v940, -inf
        %942 = vmax.xlane.f32.xlu0 %v941
        %v943 = vpop.xlane.xlu0 %942
        %v944 = vsub.f32 %v940, %v943
        %v945 = vmul.f32 %v944, 1.442695
        %v946 = vpow.pop %v945
        %v947 = vsel %vm433, %v946, 0.0
        %948 = vadd.xlane.f32.xlu0 %v947
        %v949 = vpop.xlane.xlu0 %948
        %v950 = vrcp.pop %v949
        %v951 = vmul.f32 %v949, %v950
        %v952 = vsub.f32 2.0, %v951
        %v953 = vmul.f32 %v950, %v952
        %v954 = vmul.f32 %v946, %v953
        %955 = vrot.lane.b32.xlu0 %v352, 80
        %v956 = vpop.permute.xlu0 %955
        %v959 = vsel %vm433, %v954, 0
        %961 = vmatprep.subr.mxu0 0.0
        %962 = vmatpush1.msra.mxu0 %v956
        %963 = vmatprep.subr.mxu0 0.0
        %964 = vmatpush1.msra.mxu0 0.0
        %965 = vmatprep.subr.mxu0 0.0
        %966 = vmatpush1.msra.mxu0 0.0
        %967 = vmatprep.subr.mxu0 0.0
        %968 = vmatpush1.msra.mxu0 0.0
        %969 = vmatprep.subr.mxu0 0.0
        %970 = vmatpush1.msra.mxu0 0.0
        %971 = vmatprep.subr.mxu0 0.0
        %972 = vmatpush1.msra.mxu0 0.0
        %973 = vmatprep.subr.mxu0 0.0
        %974 = vmatpush1.msra.mxu0 0.0
        %975 = vmatprep.subr.mxu0 0.0
        %976 = vmatpush1.msra.mxu0 0.0
        %977 = vmatprep.subr.mxu0 0.0
        %978 = vmatpush1.msra.mxu0 0.0
        %979 = vmatprep.subr.mxu0 0.0
        %980 = vmatpush1.msra.mxu0 0.0
        %981 = vmatprep.subr.mxu0 0.0
        %982 = vmatpush1.msra.mxu0 0.0
        %983 = vmatprep.subr.mxu0 0.0
        %984 = vmatpush1.msra.mxu0 0.0
        %985 = vmatprep.subr.mxu0 0.0
        %986 = vmatpush1.msra.mxu0 0.0
        %987 = vmatprep.subr.mxu0 0.0
        %988 = vmatpush1.msra.mxu0 0.0
        %989 = vmatprep.subr.mxu0 0.0
        %990 = vmatpush1.msra.mxu0 0.0
        %991 = vmatprep.subr.mxu0 0.0
        %992 = vmatpush1.msra.mxu0 0.0
        %993 = vmatprep.subr.mxu0 0.0
        %994 = vmatpush1.msra.mxu0 0.0
        %995 = vmatprep.subr.mxu0 0.0
        %996 = vmatpush1.msra.mxu0 0.0
        %997 = vmatprep.subr.mxu0 0.0
        %998 = vmatpush1.msra.mxu0 0.0
        %999 = vmatprep.subr.mxu0 0.0
        %1000 = vmatpush1.msra.mxu0 0.0
        %1001 = vmatprep.subr.mxu0 0.0
        %1002 = vmatpush1.msra.mxu0 0.0
        %1003 = vmatprep.subr.mxu0 0.0
        %1004 = vmatpush1.msra.mxu0 0.0
        %1005 = vmatprep.subr.mxu0 0.0
        %1006 = vmatpush1.msra.mxu0 0.0
        %1007 = vmatprep.subr.mxu0 0.0
        %1008 = vmatpush1.msra.mxu0 0.0
        %1009 = vmatprep.subr.mxu0 0.0
        %1010 = vmatpush1.msra.mxu0 0.0
        %1011 = vmatprep.subr.mxu0 0.0
        %1012 = vmatpush1.msra.mxu0 0.0
        %1013 = vmatprep.subr.mxu0 0.0
        %1014 = vmatpush1.msra.mxu0 0.0
        %1015 = vmatprep.subr.mxu0 0.0
        %1016 = vmatpush1.msra.mxu0 0.0
        %1017 = vmatprep.subr.mxu0 0.0
        %1018 = vmatpush1.msra.mxu0 0.0
        %1019 = vmatprep.subr.mxu0 0.0
        %1020 = vmatpush1.msra.mxu0 0.0
        %1021 = vmatprep.subr.mxu0 0.0
        %1022 = vmatpush1.msra.mxu0 0.0
        %1023 = vmatprep.subr.mxu0 0.0
        %1024 = vmatpush1.msra.mxu0 0.0
        %1025 = vmatprep.mubr.f32.mxu0 0.0
        %1026 = vmatmul.mubr.f32.gmra.mrb[0].mxu0 %v959
        %v1027 = vpop.f32.mrb[0].mxu0
        %v1028 = vadd.f32 0.0, %v1027
        %v1029 = vpop.f32.mrb[0].mxu0
        %1030 = vdwg.mxu0
        %v1031 = vadd.f32 %v861, %v954
        %1033 = vrot.lane.b32.xlu0 %v688, 16
        %v1034 = vpop.permute.xlu0 %1033
        %1037 = vrot.lane.b32.xlu0 %v858, 32
        %v1038 = vpop.permute.xlu0 %1037
        %1041 = vrot.lane.b32.xlu0 %v1028, 48
        %v1042 = vpop.permute.xlu0 %1041
        %v1044 = vsel %vm357, %v518, %v1034
        %v1045 = vsel %vm279, %v1044, %v1038
        %vm1046 = vcmask 392192
        %v1047 = vsel %vm1046, %v1045, %v1042
        %v1048 = vld [vmem:[%s3] sm:$0xff]
        %v1049 = vld [vmem:[%s3 + $0x8] sm:$0xff]
        %v1050 = vld [vmem:[%s3 + $0x10] sm:$0xff]
        %v1051 = vld [vmem:[%s3 + $0x18] sm:$0xff]
        %v1052 = vld [vmem:[%s3 + $0x20] sm:$0xff]
        %v1053 = vld [vmem:[%s3 + $0x28] sm:$0xff]
        %v1054 = vld [vmem:[%s3 + $0x30] sm:$0xff]
        %v1055 = vld [vmem:[%s3 + $0x38] sm:$0xff]
        %v1056 = vld [vmem:[%s4] sm:$0x1]
        %v1058 = vlaneseq
        %v1059 = vshrl.u32 %v1058, 7
        %v1060 = vsub.s32 0, %v1059
        %v1061 = vrot.slane %v1056, %v1060
        %vm1063 = vcmask 523264
        %v1065 = vsel %vm1063, %v1047, 0
        %1067 = vmatprep.subr.mxu0 0.0
        %1068 = vmatpush1.msra.mxu0 %v1048
        %1069 = vmatprep.subr.mxu0 0.0
        %1070 = vmatpush1.msra.mxu0 %v1049
        %1071 = vmatprep.subr.mxu0 0.0
        %1072 = vmatpush1.msra.mxu0 %v1050
        %1073 = vmatprep.subr.mxu0 0.0
        %1074 = vmatpush1.msra.mxu0 %v1051
        %1075 = vmatprep.subr.mxu0 0.0
        %1076 = vmatpush1.msra.mxu0 %v1052
        %1077 = vmatprep.subr.mxu0 0.0
        %1078 = vmatpush1.msra.mxu0 %v1053
        %1079 = vmatprep.subr.mxu0 0.0
        %1080 = vmatpush1.msra.mxu0 %v1054
        %1081 = vmatprep.subr.mxu0 0.0
        %1082 = vmatpush1.msra.mxu0 %v1055
        %1083 = vmatprep.subr.mxu0 0.0
        %1084 = vmatpush1.msra.mxu0 0.0
        %1085 = vmatprep.subr.mxu0 0.0
        %1086 = vmatpush1.msra.mxu0 0.0
        %1087 = vmatprep.subr.mxu0 0.0
        %1088 = vmatpush1.msra.mxu0 0.0
        %1089 = vmatprep.subr.mxu0 0.0
        %1090 = vmatpush1.msra.mxu0 0.0
        %1091 = vmatprep.subr.mxu0 0.0
        %1092 = vmatpush1.msra.mxu0 0.0
        %1093 = vmatprep.subr.mxu0 0.0
        %1094 = vmatpush1.msra.mxu0 0.0
        %1095 = vmatprep.subr.mxu0 0.0
        %1096 = vmatpush1.msra.mxu0 0.0
        %1097 = vmatprep.subr.mxu0 0.0
        %1098 = vmatpush1.msra.mxu0 0.0
        %1099 = vmatprep.subr.mxu0 0.0
        %1100 = vmatpush1.msra.mxu0 0.0
        %1101 = vmatprep.subr.mxu0 0.0
        %1102 = vmatpush1.msra.mxu0 0.0
        %1103 = vmatprep.subr.mxu0 0.0
        %1104 = vmatpush1.msra.mxu0 0.0
        %1105 = vmatprep.subr.mxu0 0.0
        %1106 = vmatpush1.msra.mxu0 0.0
        %1107 = vmatprep.subr.mxu0 0.0
        %1108 = vmatpush1.msra.mxu0 0.0
        %1109 = vmatprep.subr.mxu0 0.0
        %1110 = vmatpush1.msra.mxu0 0.0
        %1111 = vmatprep.subr.mxu0 0.0
        %1112 = vmatpush1.msra.mxu0 0.0
        %1113 = vmatprep.subr.mxu0 0.0
        %1114 = vmatpush1.msra.mxu0 0.0
        %1115 = vmatprep.subr.mxu0 0.0
        %1116 = vmatpush1.msra.mxu0 0.0
        %1117 = vmatprep.subr.mxu0 0.0
        %1118 = vmatpush1.msra.mxu0 0.0
        %1119 = vmatprep.subr.mxu0 0.0
        %1120 = vmatpush1.msra.mxu0 0.0
        %1121 = vmatprep.subr.mxu0 0.0
        %1122 = vmatpush1.msra.mxu0 0.0
        %1123 = vmatprep.subr.mxu0 0.0
        %1124 = vmatpush1.msra.mxu0 0.0
        %1125 = vmatprep.subr.mxu0 0.0
        %1126 = vmatpush1.msra.mxu0 0.0
        %1127 = vmatprep.subr.mxu0 0.0
        %1128 = vmatpush1.msra.mxu0 0.0
        %1129 = vmatprep.subr.mxu0 0.0
        %1130 = vmatpush1.msra.mxu0 0.0
        %1131 = vmatprep.mubr.f32.mxu0 0.0
        %1132 = vmatmul.mubr.f32.gmra.mrb[0].mxu0 %v1065
        %v1133 = vpop.f32.mrb[0].mxu0
        %v1134 = vadd.f32 %v1061, %v1133
        %v1135 = vpop.f32.mrb[0].mxu0
        %1136 = vdwg.mxu0
        %1137 = vst.msk [vmem:[%s246] sm:$0xff] %vm279, %v1134
        %v1138 = vmul.f32 %v1031, 0.25
        %1139 = vst.msk [vmem:[%s253] sm:$0xff] %vm433, %v1138
        %s1140 = sand.u32 %s142, 1
        %s1141 = scalar_lea.sflag [#allocation3], %s1140
        %s1142 = sand.u32 %s142, 1
        %s1143 = smul.addr %s1142, 8
        %s1144 = scalar_lea.vmem [#allocation2], %s1143
        %s1145 = sand.u32 %s168, 1
        %s1146 = scalar_lea.sflag [#allocation5], %s1145
        %s1147 = sand.u32 %s168, 1
        %s1148 = smul.addr %s1147, 8
        %s1149 = scalar_lea.vmem [#allocation4], %s1148
        // Predicated region
        $region41: #{tpu_custom_call.1} parent=39 // pred_check
          %p1150 = pneg %p152
        $region42: #{tpu_custom_call.1} parent=39 // pred_check_branch
          %1152 = sbr.rel (%p1150) target = $region44
        $region43: #{tpu_custom_call.1} parent=39 // pred_region
          %s1154 = ssub.s32 128, 128
          %1155 = vsyncadd %s1141, %s1154
          %s1156 = smul.addr %s24, 128
          %s1157 = scalar_lea.hbm %s5, %s1156
          %s1159 = sshll.u32 %s1144, 4
          %s1160 = int_to_ptr.vmem [resolvable:$true] %s1159
          %1162 = dma.vmem_to_hbm [thread:$0]  %s1160, 128, %s1157, %s1141
        $region44: #{tpu_custom_call.1} parent=39 // pred_fallthru
          _
        // Predicated region
        $region45: #{tpu_custom_call.1} parent=39 // pred_check
          %p1163 = pneg %p178
        $region46: #{tpu_custom_call.1} parent=39 // pred_check_branch
          %1165 = sbr.rel (%p1163) target = $region48
        $region47: #{tpu_custom_call.1} parent=39 // pred_region
          %s1167 = ssub.s32 128, 128
          %1168 = vsyncadd %s1146, %s1167
          %s1169 = smul.addr %s24, 128
          %s1170 = scalar_lea.hbm %s6, %s1169
          %s1172 = sshll.u32 %s1149, 4
          %s1173 = int_to_ptr.vmem [resolvable:$true] %s1172
          %1175 = dma.vmem_to_hbm [thread:$0]  %s1173, 128, %s1170, %s1146
        $region48: #{tpu_custom_call.1} parent=39 // pred_fallthru
          _
      $region40: #{tpu_custom_call.1} parent=5 // pred_fallthru
        _
      %p1176 = scmp.le.s32.totalorder 2, %s19
      // Predicated region
      $region49: #{tpu_custom_call.1} parent=5 // pred_check
        %p1177 = pneg %p1176
      $region50: #{tpu_custom_call.1} parent=5 // pred_check_branch
        %1179 = sbr.rel (%p1177) target = $region52
      $region51: #{tpu_custom_call.1} parent=5 // pred_region
        %s1180 = ssub.s32 %s19, 2
        // Predicated region
        $region53: #{tpu_custom_call.1} parent=51 // pred_check
          %p1181 = pneg %p158
        $region54: #{tpu_custom_call.1} parent=51 // pred_check_branch
          %1183 = sbr.rel (%p1181) target = $region56
        $region55: #{tpu_custom_call.1} parent=51 // pred_region
          %s1184 = sand.u32 %s143, 1
          %s1185 = scalar_lea.sflag [#allocation3], %s1184
          %s1186 = sand.u32 %s143, 1
          %s1187 = smul.addr %s1186, 8
          %s1188 = scalar_lea.vmem [#allocation2], %s1187
          %1189 = dma.done %s1185, 128
        $region56: #{tpu_custom_call.1} parent=51 // pred_fallthru
          _
        // Predicated region
        $region57: #{tpu_custom_call.1} parent=51 // pred_check
          %p1190 = pneg %p184
        $region58: #{tpu_custom_call.1} parent=51 // pred_check_branch
          %1192 = sbr.rel (%p1190) target = $region60
        $region59: #{tpu_custom_call.1} parent=51 // pred_region
          %s1193 = sand.u32 %s169, 1
          %s1194 = scalar_lea.sflag [#allocation5], %s1193
          %s1195 = sand.u32 %s169, 1
          %s1196 = smul.addr %s1195, 8
          %s1197 = scalar_lea.vmem [#allocation4], %s1196
          %1198 = dma.done %s1194, 128
        $region60: #{tpu_custom_call.1} parent=51 // pred_fallthru
          _
      $region52: #{tpu_custom_call.1} parent=5 // pred_fallthru
        _
    $region6: #{tpu_custom_call.1} parent=1 // loop_footer
      %s23 = sadd.s32 1, %s19
    $region7: #{tpu_custom_call.1} parent=1 // loop_footer_branch
      %18 = sbr.rel target = $region3
    $region8: #{tpu_custom_call.1} parent=1 // loop_exit
      _
    %1199 = vsyncpa [#allocation3], 1
    %s1200 = scalar_lea.sflag [#allocation3], 1
    %1201 = vsyncpa %s1200, 1
    %1202 = vsyncpa [#allocation5], 1
    %s1203 = scalar_lea.sflag [#allocation5], 1
    %1204 = vsyncpa %s1203, 1

</llo_original>
